<compile_context>
chip_gen: v5e
topology: v5e:2x2
jax: 0.10.0
libtpu: 0.0.40
codegen_flags: <defaults>
</compile_context>

<pallas_src>
import math
import functools

import jax
import jax.numpy as jnp
from jax.experimental import pallas as pl
from jax.experimental.pallas import tpu as pltpu

# TODO(synk): optional attention `mask` argument is not implemented (None path only).
# TODO(synk): dropout is identity (eval/inference mode), matching deterministic
#             forward semantics rather than stochastic training mode.
# TODO(synk): at large d_model, single-buffer the constant-index weight blocks
#             (pipeline_mode=pl.Buffered(1)) to reclaim VMEM for larger seq tiles.
# TODO(synk): fused [D,3D] QKV projection only applies to self-attention
#             (query is key is value); this module allows distinct q/k/v inputs,
#             so the three projections stay separate (still pre-transposed).


def _mha_kernel(q_ref, k_ref, v_ref,
                wq_ref, wk_ref, wv_ref, wo_ref, bo_ref,
                gamma_ref, beta_ref,
                out_ref, attn_ref,
                *, num_heads, d_k, eps, matmul_dtype):
    # Current (batch, q-tile) blocks.
    q_in = q_ref[0].astype(jnp.float32)    # (TQ, D)  query rows for this tile
    k_in = k_ref[0].astype(jnp.float32)    # (S,  D)  full key sequence
    v_in = v_ref[0].astype(jnp.float32)    # (S,  D)  full value sequence

    H, DK = num_heads, d_k
    scale = 1.0 / math.sqrt(DK)
    mm = matmul_dtype  # bf16 recommended on v6e/v7x at large D; f32 for the demo.

    # Projections against pre-transposed weights: x @ W_t (one MXU op each,
    # no in-kernel transpose).  W_q/W_k/W_v have no bias (matches nn.Linear(bias=False)).
    Q = jnp.dot(q_in.astype(mm), wq_ref[...].astype(mm),
                preferred_element_type=jnp.float32)            # (TQ, D)
    K = jnp.dot(k_in.astype(mm), wk_ref[...].astype(mm),
                preferred_element_type=jnp.float32)            # (S, D)
    V = jnp.dot(v_in.astype(mm), wv_ref[...].astype(mm),
                preferred_element_type=jnp.float32)            # (S, D)

    # Per-head attention via static column slices (zero-cost views; no (S,H,DK)
    # reshape / relayout).  NOTE: DK < 128 underfills the MXU — for production
    # sizes batch heads together or pad DK.
    ctx_cols = []
    for h in range(H):
        lo = h * DK
        Qh = Q[:, lo:lo + DK]              # (TQ, DK)
        Kh = K[:, lo:lo + DK]              # (S,  DK)
        Vh = V[:, lo:lo + DK]              # (S,  DK)

        # scores_h = Qh @ Kh^T expressed as a contraction over the last dims,
        # so no explicit transpose is materialized.
        s = jax.lax.dot_general(
            Qh.astype(mm), Kh.astype(mm),
            (((1,), (1,)), ((), ())),
            preferred_element_type=jnp.float32) * scale        # (TQ, S)

        # Numerically-stable softmax; divide goes to the EUP via reciprocal.
        m = jnp.max(s, axis=-1, keepdims=True)
        e = jnp.exp(s - m)
        denom = jnp.sum(e, axis=-1, keepdims=True)
        p = e * pl.reciprocal(denom, approx=True)              # (TQ, S)

        attn_ref[0, h] = p.astype(attn_ref.dtype)
        ctx_cols.append(jnp.dot(p.astype(mm), Vh.astype(mm),
                                preferred_element_type=jnp.float32))  # (TQ, DK)

    ctx = jnp.concatenate(ctx_cols, axis=-1)                   # (TQ, D)

    # Output projection (pre-transposed W_o, with bias), residual, LayerNorm.
    out = jnp.dot(ctx.astype(mm), wo_ref[...].astype(mm),
                  preferred_element_type=jnp.float32) + bo_ref[...]
    y = out + q_in                                             # residual = raw query

    mu = jnp.mean(y, axis=-1, keepdims=True)
    var = jnp.mean((y - mu) * (y - mu), axis=-1, keepdims=True)
    y_norm = (y - mu) * jax.lax.rsqrt(var + eps)
    out_ref[0] = (y_norm * gamma_ref[...] + beta_ref[...]).astype(out_ref.dtype)


def multi_head_attention(query, key, value, params, *, num_heads,
                         matmul_dtype=jnp.float32):
    """query/key/value: [B, S, D]. Returns (output [B,S,D], attn [B,H,S,S])."""
    B, S, D = query.shape
    assert D % num_heads == 0
    H = num_heads
    d_k = D // H

    # Pre-transpose PyTorch-layout [out, in] weights ONCE in the wrapper
    # (free layout plumbing; saves an XLU transpose per grid step).
    wq_t = params['wq'].T
    wk_t = params['wk'].T
    wv_t = params['wv'].T
    wo_t = params['wo'].T
    bo, gamma, beta = params['bo'], params['gamma'], params['beta']

    # Query-tile size: lane/sublane friendly and divides S.
    tq = 128 if (S % 128 == 0) else S
    n_q = S // tq

    kernel = functools.partial(_mha_kernel, num_heads=H, d_k=d_k, eps=1e-5,
                               matmul_dtype=matmul_dtype)

    q_spec = pl.BlockSpec((1, tq, D), lambda b, qi: (b, qi, 0))
    kv_spec = pl.BlockSpec((1, S, D), lambda b, qi: (b, 0, 0))
    w_spec = pl.BlockSpec((D, D), lambda b, qi: (0, 0))
    vec_spec = pl.BlockSpec((1, D), lambda b, qi: (0, 0))

    # Advisory cost estimate so XLA schedules around this fused custom call.
    flops = int(2 * B * S * D * D * 4            # q/k/v projections + output proj
                + 2 * B * H * S * S * d_k * 2)   # scores + context matmuls
    bytes_accessed = int(4 * (3 * B * S * D      # q, k, v in
                              + 4 * D * D + 3 * D
                              + B * S * D        # output
                              + B * H * S * S))  # attention weights out
    cost = pl.CostEstimate(flops=flops,
                           transcendentals=int(B * H * S * S),
                           bytes_accessed=bytes_accessed)

    out, attn = pl.pallas_call(
        kernel,
        out_shape=(
            jax.ShapeDtypeStruct((B, S, D), query.dtype),
            jax.ShapeDtypeStruct((B, H, S, S), query.dtype),
        ),
        grid_spec=pltpu.PrefetchScalarGridSpec(
            num_scalar_prefetch=0,
            grid=(B, n_q),
            in_specs=[
                q_spec, kv_spec, kv_spec,          # q, k, v
                w_spec, w_spec, w_spec, w_spec,    # W_q^T, W_k^T, W_v^T, W_o^T
                vec_spec,                          # b_o
                vec_spec, vec_spec,                # gamma, beta
            ],
            out_specs=[
                pl.BlockSpec((1, tq, D), lambda b, qi: (b, qi, 0)),
                pl.BlockSpec((1, H, tq, S), lambda b, qi: (b, 0, qi, 0)),
            ],
        ),
        compiler_params=pltpu.CompilerParams(
            dimension_semantics=("parallel", "parallel"),
            vmem_limit_bytes=64 * 1024 * 1024),
        cost_estimate=cost,
    )(query, key, value, wq_t, wk_t, wv_t, wo_t, bo, gamma, beta)
    return out, attn


def _reference(query, key, value, params, *, num_heads):
    """Pure-JAX reference mirroring the PyTorch forward (eval mode)."""
    B, S, D = query.shape
    d_k = D // num_heads
    Q = query @ params['wq'].T
    K = key @ params['wk'].T
    V = value @ params['wv'].T
    Q = Q.reshape(B, S, num_heads, d_k).transpose(0, 2, 1, 3)
    K = K.reshape(B, S, num_heads, d_k).transpose(0, 2, 1, 3)
    V = V.reshape(B, S, num_heads, d_k).transpose(0, 2, 1, 3)
    scores = jnp.einsum('bhqd,bhkd->bhqk', Q, K) / math.sqrt(d_k)
    attn = jax.nn.softmax(scores, axis=-1)
    ctx = jnp.einsum('bhqk,bhkd->bhqd', attn, V)
    ctx = ctx.transpose(0, 2, 1, 3).reshape(B, S, D)
    out = ctx @ params['wo'].T + params['bo'][0]
    y = out + query
    mu = y.mean(-1, keepdims=True)
    var = ((y - mu) ** 2).mean(-1, keepdims=True)
    yn = (y - mu) / jnp.sqrt(var + 1e-5)
    return yn * params['gamma'][0] + params['beta'][0], attn


def _init_params(key, d_model):
    """Deterministic xavier-uniform init (matches nn.init.xavier_uniform_ shapes)."""
    ks = jax.random.split(key, 5)
    bound = math.sqrt(6.0 / (d_model + d_model))  # xavier for square weight
    def xav(k):
        return jax.random.uniform(k, (d_model, d_model), jnp.float32, -bound, bound)
    b_bound = 1.0 / math.sqrt(d_model)  # PyTorch Linear default bias init
    return dict(
        wq=xav(ks[0]), wk=xav(ks[1]), wv=xav(ks[2]), wo=xav(ks[3]),
        bo=jax.random.uniform(ks[4], (1, d_model), jnp.float32, -b_bound, b_bound),
        gamma=jnp.ones((1, d_model), jnp.float32),
        beta=jnp.zeros((1, d_model), jnp.float32),
    )


if __name__ == "__main__":
    B, S, D, H = 2, 8, 32, 4

    root = jax.random.PRNGKey(0)
    kq, kk, kv, kp = jax.random.split(root, 4)
    query = jax.random.normal(kq, (B, S, D), jnp.float32)
    key = jax.random.normal(kk, (B, S, D), jnp.float32)
    value = jax.random.normal(kv, (B, S, D), jnp.float32)
    params = _init_params(kp, D)

    out, attn = multi_head_attention(query, key, value, params, num_heads=H)
    out = jax.block_until_ready(out)
    attn = jax.block_until_ready(attn)

    ref_out, ref_attn = _reference(query, key, value, params, num_heads=H)
    assert out.shape == (B, S, D)
    assert attn.shape == (B, H, S, S)
    # Tolerances loosened vs. v1 because the softmax denominator now uses the
    # approximate EUP reciprocal (pl.reciprocal(approx=True)).
    assert jnp.allclose(attn, ref_attn, atol=1e-2, rtol=1e-2)
    assert jnp.allclose(out, ref_out, atol=1e-2, rtol=1e-2)

    print("KERNEL_OK")
</pallas_src>

<mosaic_0001>
module attributes {stable_mosaic.version = 11 : i64} {
  func.func @_mha_kernel(%arg0: i32, %arg1: i32, %arg2: memref<1x8x32xf32, #tpu.memory_space<vmem>>, %arg3: memref<1x8x32xf32, #tpu.memory_space<vmem>>, %arg4: memref<1x8x32xf32, #tpu.memory_space<vmem>>, %arg5: memref<32x32xf32, #tpu.memory_space<vmem>>, %arg6: memref<32x32xf32, #tpu.memory_space<vmem>>, %arg7: memref<32x32xf32, #tpu.memory_space<vmem>>, %arg8: memref<32x32xf32, #tpu.memory_space<vmem>>, %arg9: memref<1x32xf32, #tpu.memory_space<vmem>>, %arg10: memref<1x32xf32, #tpu.memory_space<vmem>>, %arg11: memref<1x32xf32, #tpu.memory_space<vmem>>, %arg12: memref<1x8x32xf32, #tpu.memory_space<vmem>>, %arg13: memref<1x4x8x8xf32, #tpu.memory_space<vmem>>) attributes {dimension_semantics = [#tpu.dimension_semantics<parallel>, #tpu.dimension_semantics<parallel>], iteration_bounds = array<i64: 2, 1>, scalar_prefetch = 0 : i64, scratch_operands = 0 : i64, tpu.core_type = #tpu.core_type<tc>, window_params = [{transform_indices = @transform_0, window_bounds = array<i64: 1, 8, 32>}, {transform_indices = @transform_1, window_bounds = array<i64: 1, 8, 32>}, {transform_indices = @transform_2, window_bounds = array<i64: 1, 8, 32>}, {pipeline_mode = #tpu.pipeline_mode<synchronous>, transform_indices = @transform_3, window_bounds = array<i64: 32, 32>}, {pipeline_mode = #tpu.pipeline_mode<synchronous>, transform_indices = @transform_4, window_bounds = array<i64: 32, 32>}, {pipeline_mode = #tpu.pipeline_mode<synchronous>, transform_indices = @transform_5, window_bounds = array<i64: 32, 32>}, {pipeline_mode = #tpu.pipeline_mode<synchronous>, transform_indices = @transform_6, window_bounds = array<i64: 32, 32>}, {pipeline_mode = #tpu.pipeline_mode<synchronous>, transform_indices = @transform_7, window_bounds = array<i64: 1, 32>}, {pipeline_mode = #tpu.pipeline_mode<synchronous>, transform_indices = @transform_8, window_bounds = array<i64: 1, 32>}, {pipeline_mode = #tpu.pipeline_mode<synchronous>, transform_indices = @transform_9, window_bounds = array<i64: 1, 32>}, {transform_indices = @transform_10, window_bounds = array<i64: 1, 8, 32>}, {transform_indices = @transform_11, window_bounds = array<i64: 1, 4, 8, 8>}]} {
    %c0 = arith.constant 0 : index
    %c0_0 = arith.constant 0 : index
    %c0_1 = arith.constant 0 : index
    %0 = vector.load %arg2[%c0, %c0_0, %c0_1] : memref<1x8x32xf32, #tpu.memory_space<vmem>>, vector<1x8x32xf32>
    %1 = vector.shape_cast %0 : vector<1x8x32xf32> to vector<8x32xf32>
    %c0_2 = arith.constant 0 : index
    %c0_3 = arith.constant 0 : index
    %c0_4 = arith.constant 0 : index
    %2 = vector.load %arg3[%c0_2, %c0_3, %c0_4] : memref<1x8x32xf32, #tpu.memory_space<vmem>>, vector<1x8x32xf32>
    %3 = vector.shape_cast %2 : vector<1x8x32xf32> to vector<8x32xf32>
    %c0_5 = arith.constant 0 : index
    %c0_6 = arith.constant 0 : index
    %c0_7 = arith.constant 0 : index
    %4 = vector.load %arg4[%c0_5, %c0_6, %c0_7] : memref<1x8x32xf32, #tpu.memory_space<vmem>>, vector<1x8x32xf32>
    %5 = vector.shape_cast %4 : vector<1x8x32xf32> to vector<8x32xf32>
    %c0_8 = arith.constant 0 : index
    %c0_9 = arith.constant 0 : index
    %6 = vector.load %arg5[%c0_8, %c0_9] : memref<32x32xf32, #tpu.memory_space<vmem>>, vector<32x32xf32>
    %cst = arith.constant dense<0.000000e+00> : vector<8x32xf32>
    %7 = tpu.matmul %1, %6, %cst {dimension_numbers = #tpu.dot_dimension_numbers<[1], [0], [0], [1], [0, 0, 1, 1], [], []>} : vector<8x32xf32>, vector<32x32xf32>, vector<8x32xf32> -> vector<8x32xf32>
    %c0_10 = arith.constant 0 : index
    %c0_11 = arith.constant 0 : index
    %8 = vector.load %arg6[%c0_10, %c0_11] : memref<32x32xf32, #tpu.memory_space<vmem>>, vector<32x32xf32>
    %cst_12 = arith.constant dense<0.000000e+00> : vector<8x32xf32>
    %9 = tpu.matmul %3, %8, %cst_12 {dimension_numbers = #tpu.dot_dimension_numbers<[1], [0], [0], [1], [0, 0, 1, 1], [], []>} : vector<8x32xf32>, vector<32x32xf32>, vector<8x32xf32> -> vector<8x32xf32>
    %c0_13 = arith.constant 0 : index
    %c0_14 = arith.constant 0 : index
    %10 = vector.load %arg7[%c0_13, %c0_14] : memref<32x32xf32, #tpu.memory_space<vmem>>, vector<32x32xf32>
    %cst_15 = arith.constant dense<0.000000e+00> : vector<8x32xf32>
    %11 = tpu.matmul %5, %10, %cst_15 {dimension_numbers = #tpu.dot_dimension_numbers<[1], [0], [0], [1], [0, 0, 1, 1], [], []>} : vector<8x32xf32>, vector<32x32xf32>, vector<8x32xf32> -> vector<8x32xf32>
    %12 = vector.extract_strided_slice %7 {offsets = [0, 0], sizes = [8, 8], strides = [1, 1]} : vector<8x32xf32> to vector<8x8xf32>
    %13 = vector.extract_strided_slice %9 {offsets = [0, 0], sizes = [8, 8], strides = [1, 1]} : vector<8x32xf32> to vector<8x8xf32>
    %14 = vector.extract_strided_slice %11 {offsets = [0, 0], sizes = [8, 8], strides = [1, 1]} : vector<8x32xf32> to vector<8x8xf32>
    %cst_16 = arith.constant dense<0.000000e+00> : vector<8x8xf32>
    %15 = tpu.matmul %12, %13, %cst_16 {dimension_numbers = #tpu.dot_dimension_numbers<[1], [1], [0], [0], [0, 0, 1, 0], [], []>} : vector<8x8xf32>, vector<8x8xf32>, vector<8x8xf32> -> vector<8x8xf32>
    %cst_17 = arith.constant 0.353553385 : f32
    %16 = vector.broadcast %cst_17 : f32 to vector<8x8xf32>
    %17 = arith.mulf %15, %16 : vector<8x8xf32>
    %cst_18 = arith.constant dense<0xFF800000> : vector<8xf32>
    %18 = vector.multi_reduction <maximumf>, %17, %cst_18 [1] : vector<8x8xf32> to vector<8xf32>
    %19 = vector.shape_cast %18 : vector<8xf32> to vector<8x1xf32>
    %20 = vector.broadcast %19 : vector<8x1xf32> to vector<8x8xf32>
    %21 = arith.subf %17, %20 : vector<8x8xf32>
    %22 = math.exp %21 : vector<8x8xf32>
    %cst_19 = arith.constant dense<0.000000e+00> : vector<8xf32>
    %23 = vector.multi_reduction <add>, %22, %cst_19 [1] : vector<8x8xf32> to vector<8xf32>
    %24 = vector.shape_cast %23 : vector<8xf32> to vector<8x1xf32>
    %25 = tpu.reciprocal %24 {approx = true} : vector<8x1xf32> -> vector<8x1xf32>
    %26 = vector.broadcast %25 : vector<8x1xf32> to vector<8x8xf32>
    %27 = arith.mulf %22, %26 : vector<8x8xf32>
    %c0_20 = arith.constant 0 : index
    %c0_21 = arith.constant 0 : index
    %c0_22 = arith.constant 0 : index
    %c0_23 = arith.constant 0 : index
    %28 = vector.load %arg13[%c0_20, %c0_21, %c0_22, %c0_23] : memref<1x4x8x8xf32, #tpu.memory_space<vmem>>, vector<1x1x8x8xf32>
    %29 = vector.shape_cast %28 : vector<1x1x8x8xf32> to vector<8x8xf32>
    %30 = vector.shape_cast %27 : vector<8x8xf32> to vector<1x1x8x8xf32>
    tpu.vector_store %arg13[%c0_20, %c0_21, %c0_22, %c0_23], %30 {strides = array<i32>} : memref<1x4x8x8xf32, #tpu.memory_space<vmem>>, vector<1x1x8x8xf32>,
    %cst_24 = arith.constant dense<0.000000e+00> : vector<8x8xf32>
    %31 = tpu.matmul %27, %14, %cst_24 {dimension_numbers = #tpu.dot_dimension_numbers<[1], [0], [0], [1], [0, 0, 1, 1], [], []>} : vector<8x8xf32>, vector<8x8xf32>, vector<8x8xf32> -> vector<8x8xf32>
    %32 = vector.extract_strided_slice %7 {offsets = [0, 8], sizes = [8, 8], strides = [1, 1]} : vector<8x32xf32> to vector<8x8xf32>
    %33 = vector.extract_strided_slice %9 {offsets = [0, 8], sizes = [8, 8], strides = [1, 1]} : vector<8x32xf32> to vector<8x8xf32>
    %34 = vector.extract_strided_slice %11 {offsets = [0, 8], sizes = [8, 8], strides = [1, 1]} : vector<8x32xf32> to vector<8x8xf32>
    %cst_25 = arith.constant dense<0.000000e+00> : vector<8x8xf32>
    %35 = tpu.matmul %32, %33, %cst_25 {dimension_numbers = #tpu.dot_dimension_numbers<[1], [1], [0], [0], [0, 0, 1, 0], [], []>} : vector<8x8xf32>, vector<8x8xf32>, vector<8x8xf32> -> vector<8x8xf32>
    %cst_26 = arith.constant 0.353553385 : f32
    %36 = vector.broadcast %cst_26 : f32 to vector<8x8xf32>
    %37 = arith.mulf %35, %36 : vector<8x8xf32>
    %cst_27 = arith.constant dense<0xFF800000> : vector<8xf32>
    %38 = vector.multi_reduction <maximumf>, %37, %cst_27 [1] : vector<8x8xf32> to vector<8xf32>
    %39 = vector.shape_cast %38 : vector<8xf32> to vector<8x1xf32>
    %40 = vector.broadcast %39 : vector<8x1xf32> to vector<8x8xf32>
    %41 = arith.subf %37, %40 : vector<8x8xf32>
    %42 = math.exp %41 : vector<8x8xf32>
    %cst_28 = arith.constant dense<0.000000e+00> : vector<8xf32>
    %43 = vector.multi_reduction <add>, %42, %cst_28 [1] : vector<8x8xf32> to vector<8xf32>
    %44 = vector.shape_cast %43 : vector<8xf32> to vector<8x1xf32>
    %45 = tpu.reciprocal %44 {approx = true} : vector<8x1xf32> -> vector<8x1xf32>
    %46 = vector.broadcast %45 : vector<8x1xf32> to vector<8x8xf32>
    %47 = arith.mulf %42, %46 : vector<8x8xf32>
    %c0_29 = arith.constant 0 : index
    %c1 = arith.constant 1 : index
    %c0_30 = arith.constant 0 : index
    %c0_31 = arith.constant 0 : index
    %48 = vector.load %arg13[%c0_29, %c1, %c0_30, %c0_31] : memref<1x4x8x8xf32, #tpu.memory_space<vmem>>, vector<1x1x8x8xf32>
    %49 = vector.shape_cast %48 : vector<1x1x8x8xf32> to vector<8x8xf32>
    %50 = vector.shape_cast %47 : vector<8x8xf32> to vector<1x1x8x8xf32>
    tpu.vector_store %arg13[%c0_29, %c1, %c0_30, %c0_31], %50 {strides = array<i32>} : memref<1x4x8x8xf32, #tpu.memory_space<vmem>>, vector<1x1x8x8xf32>,
    %cst_32 = arith.constant dense<0.000000e+00> : vector<8x8xf32>
    %51 = tpu.matmul %47, %34, %cst_32 {dimension_numbers = #tpu.dot_dimension_numbers<[1], [0], [0], [1], [0, 0, 1, 1], [], []>} : vector<8x8xf32>, vector<8x8xf32>, vector<8x8xf32> -> vector<8x8xf32>
    %52 = vector.extract_strided_slice %7 {offsets = [0, 16], sizes = [8, 8], strides = [1, 1]} : vector<8x32xf32> to vector<8x8xf32>
    %53 = vector.extract_strided_slice %9 {offsets = [0, 16], sizes = [8, 8], strides = [1, 1]} : vector<8x32xf32> to vector<8x8xf32>
    %54 = vector.extract_strided_slice %11 {offsets = [0, 16], sizes = [8, 8], strides = [1, 1]} : vector<8x32xf32> to vector<8x8xf32>
    %cst_33 = arith.constant dense<0.000000e+00> : vector<8x8xf32>
    %55 = tpu.matmul %52, %53, %cst_33 {dimension_numbers = #tpu.dot_dimension_numbers<[1], [1], [0], [0], [0, 0, 1, 0], [], []>} : vector<8x8xf32>, vector<8x8xf32>, vector<8x8xf32> -> vector<8x8xf32>
    %cst_34 = arith.constant 0.353553385 : f32
    %56 = vector.broadcast %cst_34 : f32 to vector<8x8xf32>
    %57 = arith.mulf %55, %56 : vector<8x8xf32>
    %cst_35 = arith.constant dense<0xFF800000> : vector<8xf32>
    %58 = vector.multi_reduction <maximumf>, %57, %cst_35 [1] : vector<8x8xf32> to vector<8xf32>
    %59 = vector.shape_cast %58 : vector<8xf32> to vector<8x1xf32>
    %60 = vector.broadcast %59 : vector<8x1xf32> to vector<8x8xf32>
    %61 = arith.subf %57, %60 : vector<8x8xf32>
    %62 = math.exp %61 : vector<8x8xf32>
    %cst_36 = arith.constant dense<0.000000e+00> : vector<8xf32>
    %63 = vector.multi_reduction <add>, %62, %cst_36 [1] : vector<8x8xf32> to vector<8xf32>
    %64 = vector.shape_cast %63 : vector<8xf32> to vector<8x1xf32>
    %65 = tpu.reciprocal %64 {approx = true} : vector<8x1xf32> -> vector<8x1xf32>
    %66 = vector.broadcast %65 : vector<8x1xf32> to vector<8x8xf32>
    %67 = arith.mulf %62, %66 : vector<8x8xf32>
    %c0_37 = arith.constant 0 : index
    %c2 = arith.constant 2 : index
    %c0_38 = arith.constant 0 : index
    %c0_39 = arith.constant 0 : index
    %68 = vector.load %arg13[%c0_37, %c2, %c0_38, %c0_39] : memref<1x4x8x8xf32, #tpu.memory_space<vmem>>, vector<1x1x8x8xf32>
    %69 = vector.shape_cast %68 : vector<1x1x8x8xf32> to vector<8x8xf32>
    %70 = vector.shape_cast %67 : vector<8x8xf32> to vector<1x1x8x8xf32>
    tpu.vector_store %arg13[%c0_37, %c2, %c0_38, %c0_39], %70 {strides = array<i32>} : memref<1x4x8x8xf32, #tpu.memory_space<vmem>>, vector<1x1x8x8xf32>,
    %cst_40 = arith.constant dense<0.000000e+00> : vector<8x8xf32>
    %71 = tpu.matmul %67, %54, %cst_40 {dimension_numbers = #tpu.dot_dimension_numbers<[1], [0], [0], [1], [0, 0, 1, 1], [], []>} : vector<8x8xf32>, vector<8x8xf32>, vector<8x8xf32> -> vector<8x8xf32>
    %72 = vector.extract_strided_slice %7 {offsets = [0, 24], sizes = [8, 8], strides = [1, 1]} : vector<8x32xf32> to vector<8x8xf32>
    %73 = vector.extract_strided_slice %9 {offsets = [0, 24], sizes = [8, 8], strides = [1, 1]} : vector<8x32xf32> to vector<8x8xf32>
    %74 = vector.extract_strided_slice %11 {offsets = [0, 24], sizes = [8, 8], strides = [1, 1]} : vector<8x32xf32> to vector<8x8xf32>
    %cst_41 = arith.constant dense<0.000000e+00> : vector<8x8xf32>
    %75 = tpu.matmul %72, %73, %cst_41 {dimension_numbers = #tpu.dot_dimension_numbers<[1], [1], [0], [0], [0, 0, 1, 0], [], []>} : vector<8x8xf32>, vector<8x8xf32>, vector<8x8xf32> -> vector<8x8xf32>
    %cst_42 = arith.constant 0.353553385 : f32
    %76 = vector.broadcast %cst_42 : f32 to vector<8x8xf32>
    %77 = arith.mulf %75, %76 : vector<8x8xf32>
    %cst_43 = arith.constant dense<0xFF800000> : vector<8xf32>
    %78 = vector.multi_reduction <maximumf>, %77, %cst_43 [1] : vector<8x8xf32> to vector<8xf32>
    %79 = vector.shape_cast %78 : vector<8xf32> to vector<8x1xf32>
    %80 = vector.broadcast %79 : vector<8x1xf32> to vector<8x8xf32>
    %81 = arith.subf %77, %80 : vector<8x8xf32>
    %82 = math.exp %81 : vector<8x8xf32>
    %cst_44 = arith.constant dense<0.000000e+00> : vector<8xf32>
    %83 = vector.multi_reduction <add>, %82, %cst_44 [1] : vector<8x8xf32> to vector<8xf32>
    %84 = vector.shape_cast %83 : vector<8xf32> to vector<8x1xf32>
    %85 = tpu.reciprocal %84 {approx = true} : vector<8x1xf32> -> vector<8x1xf32>
    %86 = vector.broadcast %85 : vector<8x1xf32> to vector<8x8xf32>
    %87 = arith.mulf %82, %86 : vector<8x8xf32>
    %c0_45 = arith.constant 0 : index
    %c3 = arith.constant 3 : index
    %c0_46 = arith.constant 0 : index
    %c0_47 = arith.constant 0 : index
    %88 = vector.load %arg13[%c0_45, %c3, %c0_46, %c0_47] : memref<1x4x8x8xf32, #tpu.memory_space<vmem>>, vector<1x1x8x8xf32>
    %89 = vector.shape_cast %88 : vector<1x1x8x8xf32> to vector<8x8xf32>
    %90 = vector.shape_cast %87 : vector<8x8xf32> to vector<1x1x8x8xf32>
    tpu.vector_store %arg13[%c0_45, %c3, %c0_46, %c0_47], %90 {strides = array<i32>} : memref<1x4x8x8xf32, #tpu.memory_space<vmem>>, vector<1x1x8x8xf32>,
    %cst_48 = arith.constant dense<0.000000e+00> : vector<8x8xf32>
    %91 = tpu.matmul %87, %74, %cst_48 {dimension_numbers = #tpu.dot_dimension_numbers<[1], [0], [0], [1], [0, 0, 1, 1], [], []>} : vector<8x8xf32>, vector<8x8xf32>, vector<8x8xf32> -> vector<8x8xf32>
    %92 = tpu.concatenate %31, %51, %71, %91 in 1 : vector<8x8xf32>, vector<8x8xf32>, vector<8x8xf32>, vector<8x8xf32> -> vector<8x32xf32>
    %c0_49 = arith.constant 0 : index
    %c0_50 = arith.constant 0 : index
    %93 = vector.load %arg8[%c0_49, %c0_50] : memref<32x32xf32, #tpu.memory_space<vmem>>, vector<32x32xf32>
    %cst_51 = arith.constant dense<0.000000e+00> : vector<8x32xf32>
    %94 = tpu.matmul %92, %93, %cst_51 {dimension_numbers = #tpu.dot_dimension_numbers<[1], [0], [0], [1], [0, 0, 1, 1], [], []>} : vector<8x32xf32>, vector<32x32xf32>, vector<8x32xf32> -> vector<8x32xf32>
    %c0_52 = arith.constant 0 : index
    %c0_53 = arith.constant 0 : index
    %95 = vector.load %arg9[%c0_52, %c0_53] : memref<1x32xf32, #tpu.memory_space<vmem>>, vector<1x32xf32>
    %96 = vector.broadcast %95 : vector<1x32xf32> to vector<8x32xf32>
    %97 = arith.addf %94, %96 : vector<8x32xf32>
    %98 = arith.addf %97, %1 : vector<8x32xf32>
    %cst_54 = arith.constant dense<0.000000e+00> : vector<8xf32>
    %99 = vector.multi_reduction <add>, %98, %cst_54 [1] : vector<8x32xf32> to vector<8xf32>
    %100 = vector.shape_cast %99 : vector<8xf32> to vector<8x1xf32>
    %cst_55 = arith.constant 3.200000e+01 : f32
    %101 = vector.broadcast %cst_55 : f32 to vector<8x1xf32>
    %102 = arith.divf %100, %101 : vector<8x1xf32>
    %103 = vector.broadcast %102 : vector<8x1xf32> to vector<8x32xf32>
    %104 = arith.subf %98, %103 : vector<8x32xf32>
    %105 = vector.broadcast %102 : vector<8x1xf32> to vector<8x32xf32>
    %106 = arith.subf %98, %105 : vector<8x32xf32>
    %107 = arith.mulf %104, %106 : vector<8x32xf32>
    %cst_56 = arith.constant dense<0.000000e+00> : vector<8xf32>
    %108 = vector.multi_reduction <add>, %107, %cst_56 [1] : vector<8x32xf32> to vector<8xf32>
    %109 = vector.shape_cast %108 : vector<8xf32> to vector<8x1xf32>
    %cst_57 = arith.constant 3.200000e+01 : f32
    %110 = vector.broadcast %cst_57 : f32 to vector<8x1xf32>
    %111 = arith.divf %109, %110 : vector<8x1xf32>
    %112 = vector.broadcast %102 : vector<8x1xf32> to vector<8x32xf32>
    %113 = arith.subf %98, %112 : vector<8x32xf32>
    %cst_58 = arith.constant 9.99999974E-6 : f32
    %114 = vector.broadcast %cst_58 : f32 to vector<8x1xf32>
    %115 = arith.addf %111, %114 : vector<8x1xf32>
    %116 = math.rsqrt %115 : vector<8x1xf32>
    %117 = vector.broadcast %116 : vector<8x1xf32> to vector<8x32xf32>
    %118 = arith.mulf %113, %117 : vector<8x32xf32>
    %c0_59 = arith.constant 0 : index
    %c0_60 = arith.constant 0 : index
    %119 = vector.load %arg10[%c0_59, %c0_60] : memref<1x32xf32, #tpu.memory_space<vmem>>, vector<1x32xf32>
    %120 = vector.broadcast %119 : vector<1x32xf32> to vector<8x32xf32>
    %121 = arith.mulf %118, %120 : vector<8x32xf32>
    %c0_61 = arith.constant 0 : index
    %c0_62 = arith.constant 0 : index
    %122 = vector.load %arg11[%c0_61, %c0_62] : memref<1x32xf32, #tpu.memory_space<vmem>>, vector<1x32xf32>
    %123 = vector.broadcast %122 : vector<1x32xf32> to vector<8x32xf32>
    %124 = arith.addf %121, %123 : vector<8x32xf32>
    %c0_63 = arith.constant 0 : index
    %c0_64 = arith.constant 0 : index
    %c0_65 = arith.constant 0 : index
    %125 = vector.load %arg12[%c0_63, %c0_64, %c0_65] : memref<1x8x32xf32, #tpu.memory_space<vmem>>, vector<1x8x32xf32>
    %126 = vector.shape_cast %125 : vector<1x8x32xf32> to vector<8x32xf32>
    %127 = vector.shape_cast %124 : vector<8x32xf32> to vector<1x8x32xf32>
    tpu.vector_store %arg12[%c0_63, %c0_64, %c0_65], %127 {strides = array<i32>} : memref<1x8x32xf32, #tpu.memory_space<vmem>>, vector<1x8x32xf32>,
    return
  }
  func.func @transform_0(%arg0: i32, %arg1: i32) -> (i32, i32, i32) {
    %c0_i32 = arith.constant 0 : i32
    %c0_i32_0 = arith.constant 0 : i32
    return %arg0, %arg1, %c0_i32 : i32, i32, i32
  }
  func.func @transform_1(%arg0: i32, %arg1: i32) -> (i32, i32, i32) {
    %c0_i32 = arith.constant 0 : i32
    %c0_i32_0 = arith.constant 0 : i32
    %c0_i32_1 = arith.constant 0 : i32
    return %arg0, %c0_i32, %c0_i32_0 : i32, i32, i32
  }
  func.func @transform_2(%arg0: i32, %arg1: i32) -> (i32, i32, i32) {
    %c0_i32 = arith.constant 0 : i32
    %c0_i32_0 = arith.constant 0 : i32
    %c0_i32_1 = arith.constant 0 : i32
    return %arg0, %c0_i32, %c0_i32_0 : i32, i32, i32
  }
  func.func @transform_3(%arg0: i32, %arg1: i32) -> (i32, i32) {
    %c0_i32 = arith.constant 0 : i32
    %c0_i32_0 = arith.constant 0 : i32
    %c0_i32_1 = arith.constant 0 : i32
    return %c0_i32, %c0_i32_0 : i32, i32
  }
  func.func @transform_4(%arg0: i32, %arg1: i32) -> (i32, i32) {
    %c0_i32 = arith.constant 0 : i32
    %c0_i32_0 = arith.constant 0 : i32
    %c0_i32_1 = arith.constant 0 : i32
    return %c0_i32, %c0_i32_0 : i32, i32
  }
  func.func @transform_5(%arg0: i32, %arg1: i32) -> (i32, i32) {
    %c0_i32 = arith.constant 0 : i32
    %c0_i32_0 = arith.constant 0 : i32
    %c0_i32_1 = arith.constant 0 : i32
    return %c0_i32, %c0_i32_0 : i32, i32
  }
  func.func @transform_6(%arg0: i32, %arg1: i32) -> (i32, i32) {
    %c0_i32 = arith.constant 0 : i32
    %c0_i32_0 = arith.constant 0 : i32
    %c0_i32_1 = arith.constant 0 : i32
    return %c0_i32, %c0_i32_0 : i32, i32
  }
  func.func @transform_7(%arg0: i32, %arg1: i32) -> (i32, i32) {
    %c0_i32 = arith.constant 0 : i32
    %c0_i32_0 = arith.constant 0 : i32
    %c0_i32_1 = arith.constant 0 : i32
    return %c0_i32, %c0_i32_0 : i32, i32
  }
  func.func @transform_8(%arg0: i32, %arg1: i32) -> (i32, i32) {
    %c0_i32 = arith.constant 0 : i32
    %c0_i32_0 = arith.constant 0 : i32
    %c0_i32_1 = arith.constant 0 : i32
    return %c0_i32, %c0_i32_0 : i32, i32
  }
  func.func @transform_9(%arg0: i32, %arg1: i32) -> (i32, i32) {
    %c0_i32 = arith.constant 0 : i32
    %c0_i32_0 = arith.constant 0 : i32
    %c0_i32_1 = arith.constant 0 : i32
    return %c0_i32, %c0_i32_0 : i32, i32
  }
  func.func @transform_10(%arg0: i32, %arg1: i32) -> (i32, i32, i32) {
    %c0_i32 = arith.constant 0 : i32
    %c0_i32_0 = arith.constant 0 : i32
    return %arg0, %arg1, %c0_i32 : i32, i32, i32
  }
  func.func @transform_11(%arg0: i32, %arg1: i32) -> (i32, i32, i32, i32) {
    %c0_i32 = arith.constant 0 : i32
    %c0_i32_0 = arith.constant 0 : i32
    %c0_i32_1 = arith.constant 0 : i32
    return %arg0, %c0_i32, %arg1, %c0_i32_0 : i32, i32, i32, i32
  }
}

</mosaic_0001>

<llo_original>
// kernel: tpu_custom_call.1
$region0: #{tpu_custom_call.1}
  #allocation0 [shape = 'u32[]', space=smem, size = 0x4, offset = 0x4, fixed_abs, tag = 'smem constant byte address 0x4 - core index']
  #allocation1 [shape = 'u32[72,128]{1,0:T(1,128)}', space=vmem, size = 0x9000, scoped, tag = 'internal scratch']
  %s0 = inlined_call_operand.hbm [shape: f32[2,8,32], index: 0, kind: input, shape index: {}]
  %s1 = inlined_call_operand.hbm [shape: f32[2,8,32], index: 1, kind: input, shape index: {}]
  %s2 = inlined_call_operand.hbm [shape: f32[2,8,32], index: 2, kind: input, shape index: {}]
  %s3 = inlined_call_operand.hbm [shape: f32[32,32], index: 3, kind: input, shape index: {}]
  %s4 = inlined_call_operand.hbm [shape: f32[32,32], index: 4, kind: input, shape index: {}]
  %s5 = inlined_call_operand.hbm [shape: f32[32,32], index: 5, kind: input, shape index: {}]
  %s6 = inlined_call_operand.hbm [shape: f32[32,32], index: 6, kind: input, shape index: {}]
  %s7 = inlined_call_operand.vmem [shape: f32[1,32], index: 7, kind: input, shape index: {}]
  %s8 = inlined_call_operand.vmem [shape: f32[1,32], index: 8, kind: input, shape index: {}]
  %s9 = inlined_call_operand.vmem [shape: f32[1,32], index: 9, kind: input, shape index: {}]
  %s10 = inlined_call_operand.hbm [shape: f32[2,8,32], index: 10, kind: output, shape index: {0}]
  %s11 = inlined_call_operand.hbm [shape: f32[2,4,8,8], index: 11, kind: output, shape index: {1}]
  %12 = xla_tuple %s10, %s11
  %s13 = sld [smem:[#allocation0]]
  $region109: #{tpu_custom_call.1} parent=0
    _
  %s15 = ssub.s32 1, %s13
  %s16 = scalar_select 0, %s15, %s13
  $region1: #{tpu_custom_call.1} parent=0
    #allocation2 [shape = 'u8[8192]{0}', space=vmem, size = 0x2000, scoped, tag = 'input window, operand 0']
    #allocation3 [shape = 's32[2]{0}', space=sflag, size = 0x8, scoped, tag = 'scoped memory for tpu_custom_call.1']
    #allocation4 [shape = 's32[2]{0}', space=sflag, size = 0x8, scoped, tag = 'scoped memory for tpu_custom_call.1']
    #allocation5 [shape = 'u8[8192]{0}', space=vmem, size = 0x2000, scoped, tag = 'input window, operand 1']
    #allocation6 [shape = 's32[2]{0}', space=sflag, size = 0x8, scoped, tag = 'scoped memory for tpu_custom_call.1']
    #allocation7 [shape = 'u8[8192]{0}', space=vmem, size = 0x2000, scoped, tag = 'input window, operand 2']
    #allocation8 [shape = 'u8[16384]{0}', space=vmem, size = 0x4000, scoped, tag = 'input window, operand 3, single buffered']
    #allocation9 [shape = 's32[1]{0}', space=sflag, size = 0x4, scoped, tag = 'scoped memory for tpu_custom_call.1']
    #allocation10 [shape = 'u8[16384]{0}', space=vmem, size = 0x4000, scoped, tag = 'input window, operand 4, single buffered']
    #allocation11 [shape = 'u8[16384]{0}', space=vmem, size = 0x4000, scoped, tag = 'input window, operand 5, single buffered']
    #allocation12 [shape = 's32[1]{0}', space=sflag, size = 0x4, scoped, tag = 'scoped memory for tpu_custom_call.1']
    #allocation13 [shape = 'u8[16384]{0}', space=vmem, size = 0x4000, scoped, tag = 'input window, operand 6, single buffered']
    #allocation14 [shape = 'u8[8192]{0}', space=vmem, size = 0x2000, scoped, tag = 'output window, operand 0']
    #allocation15 [shape = 'u8[32768]{0}', space=vmem, size = 0x8000, scoped, tag = 'output window, operand 1']
    #allocation16 [shape = 's32[2]{0}', space=sflag, size = 0x8, scoped, tag = 'scoped memory for tpu_custom_call.1']
    %17 = vsyncpa [#allocation3], 0
    %s18 = scalar_lea.sflag [#allocation3], 1
    %19 = vsyncpa %s18, 0
    %20 = vsyncpa [#allocation6], 0
    %s21 = scalar_lea.sflag [#allocation6], 1
    %22 = vsyncpa %s21, 0
    %23 = vsyncpa [#allocation9], 0
    %24 = vsyncpa [#allocation12], 0
    %25 = vsyncpa [#allocation4], 0
    %s26 = scalar_lea.sflag [#allocation4], 1
    %27 = vsyncpa %s26, 0
    %28 = vsyncpa [#allocation16], 0
    %s29 = scalar_lea.sflag [#allocation16], 1
    %30 = vsyncpa %s29, 0
    loop: start=0, step=1, limit=4
    $region2: #{tpu_custom_call.1} parent=1 // loop_pre_header
      _
    $region3: #{tpu_custom_call.1} parent=1 // loop_header
      %s32 = sphi 0, %s36
      %p33 = scmp.ge.s32.totalorder %s32, 4
      %s39 = sphi 0, %s51
      %s40 = sphi 0, %s47
      %s41 = sphi 0, %s39
      %s42 = sphi 0, %s40
      %s43 = sphi 0, %s41
      %s44 = sphi 0, %s42
      %s56 = sphi 0, %s58
      %s59 = sphi 0, %s56
      %s60 = sphi 0, %s59
      %s76 = sphi 0, %s60
      %s82 = sphi 0, %s84
      %s85 = sphi 0, %s82
      %s86 = sphi 0, %s85
      %s102 = sphi 0, %s86
      %s108 = sphi 0, %s110
      %s111 = sphi 0, %s108
      %s112 = sphi 0, %s111
      %s128 = sphi 0, %s112
      %s132 = sphi 0, %s132
      %s134 = sphi 0, %s132
      %s135 = sphi 0, %s134
      %s149 = sphi 0, %s135
      %s153 = sphi 0, %s153
      %s155 = sphi 0, %s153
      %s156 = sphi 0, %s155
      %s170 = sphi 0, %s156
      %s174 = sphi 0, %s174
      %s176 = sphi 0, %s174
      %s177 = sphi 0, %s176
      %s191 = sphi 0, %s177
      %s195 = sphi 0, %s195
      %s197 = sphi 0, %s195
      %s198 = sphi 0, %s197
      %s212 = sphi 0, %s198
      %s216 = sphi 0, %s216
      %s218 = sphi 0, %s216
      %s219 = sphi 0, %s218
      %s233 = sphi 0, %s219
      %s237 = sphi 0, %s237
      %s239 = sphi 0, %s237
      %s240 = sphi 0, %s239
      %s254 = sphi 0, %s240
      %s258 = sphi 0, %s258
      %s260 = sphi 0, %s258
      %s261 = sphi 0, %s260
      %s275 = sphi 0, %s261
      %s283 = sphi 0, %s285
      %s286 = sphi 0, %s283
      %s287 = sphi 0, %s286
      %s303 = sphi 0, %s287
      %s311 = sphi 0, %s313
      %s314 = sphi 0, %s311
      %s315 = sphi 0, %s314
      %s331 = sphi 0, %s315
    $region4: #{tpu_custom_call.1} parent=1 // loop_header_branch
      %35 = sbr.rel (%p33) target = $region8
    $region5: #{tpu_custom_call.1} parent=1 // loop_body
      %s37 = ssub.s32 %s32, 1
      %s38 = ssub.s32 %s32, 2
      %s45 = sadd.s32 1, %s40
      %p46 = scmp.ge.s32.totalorder %s45, 1
      %s47 = scalar_select %p46, 0, %s45
      %s48 = sadd.s32 1, %s39
      %s49 = scalar_select %p46, %s48, %s39
      %p50 = scmp.ge.s32.totalorder %s49, 2
      %s51 = scalar_select %p50, 0, %s49
      %s52 = ssub.s32 %s39, %s51
      %s53 = ssub.s32 %s40, %s47
      %s54 = sor.u32 %s52, %s53
      %p55 = scmp.eq.s32.totalorder %s54, 0
      %s57 = sadd.s32 %s56, 1
      %s58 = scalar_select %p55, %s56, %s57
      %p61 = pneg %p55
      %p62 = scmp.eq.s32.totalorder %s32, 1
      %p63 = por %p61, %p62
      %p64 = scmp.ne.s32.totalorder %s56, %s59
      %p65 = scmp.eq.s32.totalorder %s32, 0
      %p66 = por %p64, %p65
      %p67 = scmp.ne.s32.totalorder %s56, %s59
      %p68 = scmp.eq.s32.totalorder %s37, 1
      %p69 = por %p67, %p68
      %p70 = scmp.ne.s32.totalorder %s59, %s60
      %p71 = scmp.eq.s32.totalorder %s37, 0
      %p72 = por %p70, %p71
      %p73 = scmp.ne.s32.totalorder %s59, %s60
      %p74 = scmp.eq.s32.totalorder %s38, 1
      %p75 = por %p73, %p74
      %p77 = scmp.ne.s32.totalorder %s60, %s76
      %p78 = scmp.eq.s32.totalorder %s38, 0
      %p79 = por %p77, %p78
      %s80 = ssub.s32 %s39, %s51
      %p81 = scmp.eq.s32.totalorder %s80, 0
      %s83 = sadd.s32 %s82, 1
      %s84 = scalar_select %p81, %s82, %s83
      %p87 = pneg %p81
      %p88 = scmp.eq.s32.totalorder %s32, 1
      %p89 = por %p87, %p88
      %p90 = scmp.ne.s32.totalorder %s82, %s85
      %p91 = scmp.eq.s32.totalorder %s32, 0
      %p92 = por %p90, %p91
      %p93 = scmp.ne.s32.totalorder %s82, %s85
      %p94 = scmp.eq.s32.totalorder %s37, 1
      %p95 = por %p93, %p94
      %p96 = scmp.ne.s32.totalorder %s85, %s86
      %p97 = scmp.eq.s32.totalorder %s37, 0
      %p98 = por %p96, %p97
      %p99 = scmp.ne.s32.totalorder %s85, %s86
      %p100 = scmp.eq.s32.totalorder %s38, 1
      %p101 = por %p99, %p100
      %p103 = scmp.ne.s32.totalorder %s86, %s102
      %p104 = scmp.eq.s32.totalorder %s38, 0
      %p105 = por %p103, %p104
      %s106 = ssub.s32 %s39, %s51
      %p107 = scmp.eq.s32.totalorder %s106, 0
      %s109 = sadd.s32 %s108, 1
      %s110 = scalar_select %p107, %s108, %s109
      %p113 = pneg %p107
      %p114 = scmp.eq.s32.totalorder %s32, 1
      %p115 = por %p113, %p114
      %p116 = scmp.ne.s32.totalorder %s108, %s111
      %p117 = scmp.eq.s32.totalorder %s32, 0
      %p118 = por %p116, %p117
      %p119 = scmp.ne.s32.totalorder %s108, %s111
      %p120 = scmp.eq.s32.totalorder %s37, 1
      %p121 = por %p119, %p120
      %p122 = scmp.ne.s32.totalorder %s111, %s112
      %p123 = scmp.eq.s32.totalorder %s37, 0
      %p124 = por %p122, %p123
      %p125 = scmp.ne.s32.totalorder %s111, %s112
      %p126 = scmp.eq.s32.totalorder %s38, 1
      %p127 = por %p125, %p126
      %p129 = scmp.ne.s32.totalorder %s112, %s128
      %p130 = scmp.eq.s32.totalorder %s38, 0
      %p131 = por %p129, %p130
      %s133 = sadd.s32 %s132, 1
      %p136 = scmp.eq.s32.totalorder %s32, 1
      %p137 = scmp.ne.s32.totalorder %s132, %s134
      %p138 = scmp.eq.s32.totalorder %s32, 0
      %p139 = por %p137, %p138
      %p140 = scmp.ne.s32.totalorder %s132, %s134
      %p141 = scmp.eq.s32.totalorder %s37, 1
      %p142 = por %p140, %p141
      %p143 = scmp.ne.s32.totalorder %s134, %s135
      %p144 = scmp.eq.s32.totalorder %s37, 0
      %p145 = por %p143, %p144
      %p146 = scmp.ne.s32.totalorder %s134, %s135
      %p147 = scmp.eq.s32.totalorder %s38, 1
      %p148 = por %p146, %p147
      %p150 = scmp.ne.s32.totalorder %s135, %s149
      %p151 = scmp.eq.s32.totalorder %s38, 0
      %p152 = por %p150, %p151
      %s154 = sadd.s32 %s153, 1
      %p157 = scmp.eq.s32.totalorder %s32, 1
      %p158 = scmp.ne.s32.totalorder %s153, %s155
      %p159 = scmp.eq.s32.totalorder %s32, 0
      %p160 = por %p158, %p159
      %p161 = scmp.ne.s32.totalorder %s153, %s155
      %p162 = scmp.eq.s32.totalorder %s37, 1
      %p163 = por %p161, %p162
      %p164 = scmp.ne.s32.totalorder %s155, %s156
      %p165 = scmp.eq.s32.totalorder %s37, 0
      %p166 = por %p164, %p165
      %p167 = scmp.ne.s32.totalorder %s155, %s156
      %p168 = scmp.eq.s32.totalorder %s38, 1
      %p169 = por %p167, %p168
      %p171 = scmp.ne.s32.totalorder %s156, %s170
      %p172 = scmp.eq.s32.totalorder %s38, 0
      %p173 = por %p171, %p172
      %s175 = sadd.s32 %s174, 1
      %p178 = scmp.eq.s32.totalorder %s32, 1
      %p179 = scmp.ne.s32.totalorder %s174, %s176
      %p180 = scmp.eq.s32.totalorder %s32, 0
      %p181 = por %p179, %p180
      %p182 = scmp.ne.s32.totalorder %s174, %s176
      %p183 = scmp.eq.s32.totalorder %s37, 1
      %p184 = por %p182, %p183
      %p185 = scmp.ne.s32.totalorder %s176, %s177
      %p186 = scmp.eq.s32.totalorder %s37, 0
      %p187 = por %p185, %p186
      %p188 = scmp.ne.s32.totalorder %s176, %s177
      %p189 = scmp.eq.s32.totalorder %s38, 1
      %p190 = por %p188, %p189
      %p192 = scmp.ne.s32.totalorder %s177, %s191
      %p193 = scmp.eq.s32.totalorder %s38, 0
      %p194 = por %p192, %p193
      %s196 = sadd.s32 %s195, 1
      %p199 = scmp.eq.s32.totalorder %s32, 1
      %p200 = scmp.ne.s32.totalorder %s195, %s197
      %p201 = scmp.eq.s32.totalorder %s32, 0
      %p202 = por %p200, %p201
      %p203 = scmp.ne.s32.totalorder %s195, %s197
      %p204 = scmp.eq.s32.totalorder %s37, 1
      %p205 = por %p203, %p204
      %p206 = scmp.ne.s32.totalorder %s197, %s198
      %p207 = scmp.eq.s32.totalorder %s37, 0
      %p208 = por %p206, %p207
      %p209 = scmp.ne.s32.totalorder %s197, %s198
      %p210 = scmp.eq.s32.totalorder %s38, 1
      %p211 = por %p209, %p210
      %p213 = scmp.ne.s32.totalorder %s198, %s212
      %p214 = scmp.eq.s32.totalorder %s38, 0
      %p215 = por %p213, %p214
      %s217 = sadd.s32 %s216, 1
      %p220 = scmp.eq.s32.totalorder %s32, 1
      %p221 = scmp.ne.s32.totalorder %s216, %s218
      %p222 = scmp.eq.s32.totalorder %s32, 0
      %p223 = por %p221, %p222
      %p224 = scmp.ne.s32.totalorder %s216, %s218
      %p225 = scmp.eq.s32.totalorder %s37, 1
      %p226 = por %p224, %p225
      %p227 = scmp.ne.s32.totalorder %s218, %s219
      %p228 = scmp.eq.s32.totalorder %s37, 0
      %p229 = por %p227, %p228
      %p230 = scmp.ne.s32.totalorder %s218, %s219
      %p231 = scmp.eq.s32.totalorder %s38, 1
      %p232 = por %p230, %p231
      %p234 = scmp.ne.s32.totalorder %s219, %s233
      %p235 = scmp.eq.s32.totalorder %s38, 0
      %p236 = por %p234, %p235
      %s238 = sadd.s32 %s237, 1
      %p241 = scmp.eq.s32.totalorder %s32, 1
      %p242 = scmp.ne.s32.totalorder %s237, %s239
      %p243 = scmp.eq.s32.totalorder %s32, 0
      %p244 = por %p242, %p243
      %p245 = scmp.ne.s32.totalorder %s237, %s239
      %p246 = scmp.eq.s32.totalorder %s37, 1
      %p247 = por %p245, %p246
      %p248 = scmp.ne.s32.totalorder %s239, %s240
      %p249 = scmp.eq.s32.totalorder %s37, 0
      %p250 = por %p248, %p249
      %p251 = scmp.ne.s32.totalorder %s239, %s240
      %p252 = scmp.eq.s32.totalorder %s38, 1
      %p253 = por %p251, %p252
      %p255 = scmp.ne.s32.totalorder %s240, %s254
      %p256 = scmp.eq.s32.totalorder %s38, 0
      %p257 = por %p255, %p256
      %s259 = sadd.s32 %s258, 1
      %p262 = scmp.eq.s32.totalorder %s32, 1
      %p263 = scmp.ne.s32.totalorder %s258, %s260
      %p264 = scmp.eq.s32.totalorder %s32, 0
      %p265 = por %p263, %p264
      %p266 = scmp.ne.s32.totalorder %s258, %s260
      %p267 = scmp.eq.s32.totalorder %s37, 1
      %p268 = por %p266, %p267
      %p269 = scmp.ne.s32.totalorder %s260, %s261
      %p270 = scmp.eq.s32.totalorder %s37, 0
      %p271 = por %p269, %p270
      %p272 = scmp.ne.s32.totalorder %s260, %s261
      %p273 = scmp.eq.s32.totalorder %s38, 1
      %p274 = por %p272, %p273
      %p276 = scmp.ne.s32.totalorder %s261, %s275
      %p277 = scmp.eq.s32.totalorder %s38, 0
      %p278 = por %p276, %p277
      %s279 = ssub.s32 %s39, %s51
      %s280 = ssub.s32 %s40, %s47
      %s281 = sor.u32 %s279, %s280
      %p282 = scmp.eq.s32.totalorder %s281, 0
      %s284 = sadd.s32 %s283, 1
      %s285 = scalar_select %p282, %s283, %s284
      %p288 = pneg %p282
      %p289 = scmp.eq.s32.totalorder %s32, 1
      %p290 = por %p288, %p289
      %p291 = scmp.ne.s32.totalorder %s283, %s286
      %p292 = scmp.eq.s32.totalorder %s32, 0
      %p293 = por %p291, %p292
      %p294 = scmp.ne.s32.totalorder %s283, %s286
      %p295 = scmp.eq.s32.totalorder %s37, 1
      %p296 = por %p294, %p295
      %p297 = scmp.ne.s32.totalorder %s286, %s287
      %p298 = scmp.eq.s32.totalorder %s37, 0
      %p299 = por %p297, %p298
      %p300 = scmp.ne.s32.totalorder %s286, %s287
      %p301 = scmp.eq.s32.totalorder %s38, 1
      %p302 = por %p300, %p301
      %p304 = scmp.ne.s32.totalorder %s287, %s303
      %p305 = scmp.eq.s32.totalorder %s38, 0
      %p306 = por %p304, %p305
      %s307 = ssub.s32 %s39, %s51
      %s308 = ssub.s32 %s40, %s47
      %s309 = sor.u32 %s307, %s308
      %p310 = scmp.eq.s32.totalorder %s309, 0
      %s312 = sadd.s32 %s311, 1
      %s313 = scalar_select %p310, %s311, %s312
      %p316 = pneg %p310
      %p317 = scmp.eq.s32.totalorder %s32, 1
      %p318 = por %p316, %p317
      %p319 = scmp.ne.s32.totalorder %s311, %s314
      %p320 = scmp.eq.s32.totalorder %s32, 0
      %p321 = por %p319, %p320
      %p322 = scmp.ne.s32.totalorder %s311, %s314
      %p323 = scmp.eq.s32.totalorder %s37, 1
      %p324 = por %p322, %p323
      %p325 = scmp.ne.s32.totalorder %s314, %s315
      %p326 = scmp.eq.s32.totalorder %s37, 0
      %p327 = por %p325, %p326
      %p328 = scmp.ne.s32.totalorder %s314, %s315
      %p329 = scmp.eq.s32.totalorder %s38, 1
      %p330 = por %p328, %p329
      %p332 = scmp.ne.s32.totalorder %s315, %s331
      %p333 = scmp.eq.s32.totalorder %s38, 0
      %p334 = por %p332, %p333
      %p335 = scmp.le.s32.totalorder 1, %s32
      %p336 = scmp.lt.s32.totalorder %s32, 3
      %p337 = pnand %p335, %p336
      %p338 = pneg %p337
      // Predicated region
      $region9: #{tpu_custom_call.1} parent=5 // pred_check
        _
      $region10: #{tpu_custom_call.1} parent=5 // pred_check_branch
        %340 = sbr.rel (%p337) target = $region12
      $region11: #{tpu_custom_call.1} parent=5 // pred_region
        %s341 = ssub.s32 %s32, 1
        // Predicated region
        $region13: #{tpu_custom_call.1} parent=11 // pred_check
          %p342 = pneg %p145
        $region14: #{tpu_custom_call.1} parent=11 // pred_check_branch
          %344 = sbr.rel (%p342) target = $region16
        $region15: #{tpu_custom_call.1} parent=11 // pred_region
          %346 = vsyncadd [#allocation9], 0
          %s347 = sshll.u32 %s3, 4
          %s348 = int_to_ptr.hbm [resolvable:$true] %s347
          %s349 = sshll.u32 [#allocation8], 4
          %s350 = int_to_ptr.vmem [resolvable:$true] %s349
          %355 = dma.hbm_to_vmem [thread:$0]  %s348, 512, %s350, [#allocation9], 128, 128, 8
        $region16: #{tpu_custom_call.1} parent=11 // pred_fallthru
          _
        // Predicated region
        $region17: #{tpu_custom_call.1} parent=11 // pred_check
          %p356 = pneg %p166
        $region18: #{tpu_custom_call.1} parent=11 // pred_check_branch
          %358 = sbr.rel (%p356) target = $region20
        $region19: #{tpu_custom_call.1} parent=11 // pred_region
          %360 = vsyncadd [#allocation9], 0
          %s361 = sshll.u32 %s4, 4
          %s362 = int_to_ptr.hbm [resolvable:$true] %s361
          %s363 = sshll.u32 [#allocation10], 4
          %s364 = int_to_ptr.vmem [resolvable:$true] %s363
          %369 = dma.hbm_to_vmem [thread:$0]  %s362, 512, %s364, [#allocation9], 128, 128, 8
        $region20: #{tpu_custom_call.1} parent=11 // pred_fallthru
          _
        // Predicated region
        $region21: #{tpu_custom_call.1} parent=11 // pred_check
          %p370 = pneg %p187
        $region22: #{tpu_custom_call.1} parent=11 // pred_check_branch
          %372 = sbr.rel (%p370) target = $region24
        $region23: #{tpu_custom_call.1} parent=11 // pred_region
          %374 = vsyncadd [#allocation12], 0
          %s375 = sshll.u32 %s5, 4
          %s376 = int_to_ptr.hbm [resolvable:$true] %s375
          %s377 = sshll.u32 [#allocation11], 4
          %s378 = int_to_ptr.vmem [resolvable:$true] %s377
          %383 = dma.hbm_to_vmem [thread:$0]  %s376, 512, %s378, [#allocation12], 128, 128, 8
        $region24: #{tpu_custom_call.1} parent=11 // pred_fallthru
          _
        // Predicated region
        $region25: #{tpu_custom_call.1} parent=11 // pred_check
          %p384 = pneg %p208
        $region26: #{tpu_custom_call.1} parent=11 // pred_check_branch
          %386 = sbr.rel (%p384) target = $region28
        $region27: #{tpu_custom_call.1} parent=11 // pred_region
          %388 = vsyncadd [#allocation12], 0
          %s389 = sshll.u32 %s6, 4
          %s390 = int_to_ptr.hbm [resolvable:$true] %s389
          %s391 = sshll.u32 [#allocation13], 4
          %s392 = int_to_ptr.vmem [resolvable:$true] %s391
          %397 = dma.hbm_to_vmem [thread:$0]  %s390, 512, %s392, [#allocation12], 128, 128, 8
        $region28: #{tpu_custom_call.1} parent=11 // pred_fallthru
          _
        // Predicated region
        $region29: #{tpu_custom_call.1} parent=11 // pred_check
          %p398 = pneg %p229
        $region30: #{tpu_custom_call.1} parent=11 // pred_check_branch
          %400 = sbr.rel (%p398) target = $region32
        $region31: #{tpu_custom_call.1} parent=11 // pred_region
          _
        $region32: #{tpu_custom_call.1} parent=11 // pred_fallthru
          _
        // Predicated region
        $region33: #{tpu_custom_call.1} parent=11 // pred_check
          %p401 = pneg %p250
        $region34: #{tpu_custom_call.1} parent=11 // pred_check_branch
          %403 = sbr.rel (%p401) target = $region36
        $region35: #{tpu_custom_call.1} parent=11 // pred_region
          _
        $region36: #{tpu_custom_call.1} parent=11 // pred_fallthru
          _
        // Predicated region
        $region37: #{tpu_custom_call.1} parent=11 // pred_check
          %p404 = pneg %p271
        $region38: #{tpu_custom_call.1} parent=11 // pred_check_branch
          %406 = sbr.rel (%p404) target = $region40
        $region39: #{tpu_custom_call.1} parent=11 // pred_region
          _
        $region40: #{tpu_custom_call.1} parent=11 // pred_fallthru
          _
      $region12: #{tpu_custom_call.1} parent=5 // pred_fallthru
        _
      %p407 = scmp.lt.s32.totalorder %s32, 2
      // Predicated region
      $region41: #{tpu_custom_call.1} parent=5 // pred_check
        %p408 = pneg %p407
      $region42: #{tpu_custom_call.1} parent=5 // pred_check_branch
        %410 = sbr.rel (%p408) target = $region44
      $region43: #{tpu_custom_call.1} parent=5 // pred_region
        // Predicated region
        $region45: #{tpu_custom_call.1} parent=43 // pred_check
          %p411 = pneg %p66
        $region46: #{tpu_custom_call.1} parent=43 // pred_check_branch
          %413 = sbr.rel (%p411) target = $region48
        $region47: #{tpu_custom_call.1} parent=43 // pred_region
          %s414 = sand.u32 %s56, 1
          %s415 = scalar_lea.sflag [#allocation3], %s414
          %s416 = sand.u32 %s56, 1
          %s417 = smul.addr %s416, 8
          %s418 = scalar_lea.vmem [#allocation2], %s417
          %420 = vsyncadd %s415, 0
          %s421 = sadd.s32 %s40, %s39
          %s422 = smul.addr %s421, 8
          %s423 = scalar_lea.hbm %s0, %s422
          %s425 = sshll.u32 %s423, 4
          %s426 = int_to_ptr.hbm [resolvable:$true] %s425
          %s427 = sshll.u32 %s418, 4
          %s428 = int_to_ptr.vmem [resolvable:$true] %s427
          %430 = dma.hbm_to_vmem [thread:$0]  %s426, 128, %s428, %s415
        $region48: #{tpu_custom_call.1} parent=43 // pred_fallthru
          _
        // Predicated region
        $region49: #{tpu_custom_call.1} parent=43 // pred_check
          %p431 = pneg %p92
        $region50: #{tpu_custom_call.1} parent=43 // pred_check_branch
          %433 = sbr.rel (%p431) target = $region52
        $region51: #{tpu_custom_call.1} parent=43 // pred_region
          %s434 = sand.u32 %s32, 1
          %s435 = scalar_lea.sflag [#allocation6], %s434
          %s436 = sand.u32 %s82, 1
          %s437 = smul.addr %s436, 8
          %s438 = scalar_lea.vmem [#allocation5], %s437
          %440 = vsyncadd %s435, 0
          %s441 = smul.addr %s39, 8
          %s442 = scalar_lea.hbm %s1, %s441
          %s444 = sshll.u32 %s442, 4
          %s445 = int_to_ptr.hbm [resolvable:$true] %s444
          %s446 = sshll.u32 %s438, 4
          %s447 = int_to_ptr.vmem [resolvable:$true] %s446
          %449 = dma.hbm_to_vmem [thread:$0]  %s445, 128, %s447, %s435
        $region52: #{tpu_custom_call.1} parent=43 // pred_fallthru
          _
        // Predicated region
        $region53: #{tpu_custom_call.1} parent=43 // pred_check
          %p450 = pneg %p118
        $region54: #{tpu_custom_call.1} parent=43 // pred_check_branch
          %452 = sbr.rel (%p450) target = $region56
        $region55: #{tpu_custom_call.1} parent=43 // pred_region
          %s453 = sand.u32 %s32, 1
          %s454 = scalar_lea.sflag [#allocation6], %s453
          %s455 = sand.u32 %s108, 1
          %s456 = smul.addr %s455, 8
          %s457 = scalar_lea.vmem [#allocation7], %s456
          %459 = vsyncadd %s454, 0
          %s460 = smul.addr %s39, 8
          %s461 = scalar_lea.hbm %s2, %s460
          %s463 = sshll.u32 %s461, 4
          %s464 = int_to_ptr.hbm [resolvable:$true] %s463
          %s465 = sshll.u32 %s457, 4
          %s466 = int_to_ptr.vmem [resolvable:$true] %s465
          %468 = dma.hbm_to_vmem [thread:$0]  %s464, 128, %s466, %s454
        $region56: #{tpu_custom_call.1} parent=43 // pred_fallthru
          _
      $region44: #{tpu_custom_call.1} parent=5 // pred_fallthru
        _
      %p469 = scmp.le.s32.totalorder 1, %s32
      %p470 = scmp.lt.s32.totalorder %s32, 3
      %p471 = pnand %p469, %p470
      %p472 = pneg %p471
      // Predicated region
      $region57: #{tpu_custom_call.1} parent=5 // pred_check
        _
      $region58: #{tpu_custom_call.1} parent=5 // pred_check_branch
        %474 = sbr.rel (%p471) target = $region60
      $region59: #{tpu_custom_call.1} parent=5 // pred_region
        %s475 = ssub.s32 %s32, 1
        %s476 = sand.u32 %s59, 1
        %s477 = scalar_lea.sflag [#allocation3], %s476
        %s478 = sand.u32 %s59, 1
        %s479 = smul.addr %s478, 8
        %s480 = scalar_lea.vmem [#allocation2], %s479
        // Predicated region
        $region61: #{tpu_custom_call.1} parent=59 // pred_check
          %p481 = pneg %p72
        $region62: #{tpu_custom_call.1} parent=59 // pred_check_branch
          %483 = sbr.rel (%p481) target = $region64
        $region63: #{tpu_custom_call.1} parent=59 // pred_region
          %485 = dma.done %s477, 128
        $region64: #{tpu_custom_call.1} parent=59 // pred_fallthru
          _
        %s486 = sand.u32 %s37, 1
        %s487 = scalar_lea.sflag [#allocation6], %s486
        %s488 = sand.u32 %s85, 1
        %s489 = smul.addr %s488, 8
        %s490 = scalar_lea.vmem [#allocation5], %s489
        // Predicated region
        $region65: #{tpu_custom_call.1} parent=59 // pred_check
          %p491 = pneg %p98
        $region66: #{tpu_custom_call.1} parent=59 // pred_check_branch
          %493 = sbr.rel (%p491) target = $region68
        $region67: #{tpu_custom_call.1} parent=59 // pred_region
          %495 = dma.done %s487, 128
        $region68: #{tpu_custom_call.1} parent=59 // pred_fallthru
          _
        %s496 = sand.u32 %s37, 1
        %s497 = scalar_lea.sflag [#allocation6], %s496
        %s498 = sand.u32 %s111, 1
        %s499 = smul.addr %s498, 8
        %s500 = scalar_lea.vmem [#allocation7], %s499
        // Predicated region
        $region69: #{tpu_custom_call.1} parent=59 // pred_check
          %p501 = pneg %p124
        $region70: #{tpu_custom_call.1} parent=59 // pred_check_branch
          %503 = sbr.rel (%p501) target = $region72
        $region71: #{tpu_custom_call.1} parent=59 // pred_region
          %505 = dma.done %s497, 128
        $region72: #{tpu_custom_call.1} parent=59 // pred_fallthru
          _
        // Predicated region
        $region73: #{tpu_custom_call.1} parent=59 // pred_check
          %p506 = pneg %p145
        $region74: #{tpu_custom_call.1} parent=59 // pred_check_branch
          %508 = sbr.rel (%p506) target = $region76
        $region75: #{tpu_custom_call.1} parent=59 // pred_region
          %510 = dma.done [#allocation9], 512
        $region76: #{tpu_custom_call.1} parent=59 // pred_fallthru
          _
        // Predicated region
        $region77: #{tpu_custom_call.1} parent=59 // pred_check
          %p511 = pneg %p166
        $region78: #{tpu_custom_call.1} parent=59 // pred_check_branch
          %513 = sbr.rel (%p511) target = $region80
        $region79: #{tpu_custom_call.1} parent=59 // pred_region
          %515 = dma.done [#allocation9], 512
        $region80: #{tpu_custom_call.1} parent=59 // pred_fallthru
          _
        // Predicated region
        $region81: #{tpu_custom_call.1} parent=59 // pred_check
          %p516 = pneg %p187
        $region82: #{tpu_custom_call.1} parent=59 // pred_check_branch
          %518 = sbr.rel (%p516) target = $region84
        $region83: #{tpu_custom_call.1} parent=59 // pred_region
          %520 = dma.done [#allocation12], 512
        $region84: #{tpu_custom_call.1} parent=59 // pred_fallthru
          _
        // Predicated region
        $region85: #{tpu_custom_call.1} parent=59 // pred_check
          %p521 = pneg %p208
        $region86: #{tpu_custom_call.1} parent=59 // pred_check_branch
          %523 = sbr.rel (%p521) target = $region88
        $region87: #{tpu_custom_call.1} parent=59 // pred_region
          %525 = dma.done [#allocation12], 512
        $region88: #{tpu_custom_call.1} parent=59 // pred_fallthru
          _
        %s526 = sand.u32 %s59, 1
        %s527 = scalar_lea.sflag [#allocation3], %s526
        %s528 = sand.u32 %s59, 1
        %s529 = smul.addr %s528, 8
        %s530 = scalar_lea.vmem [#allocation2], %s529
        %p531 = pneg %p72
        %p532 = pneg %p69
        %s533 = sand.u32 %s37, 1
        %s534 = scalar_lea.sflag [#allocation6], %s533
        %s535 = sand.u32 %s85, 1
        %s536 = smul.addr %s535, 8
        %s537 = scalar_lea.vmem [#allocation5], %s536
        %p538 = pneg %p98
        %p539 = pneg %p95
        %s540 = sand.u32 %s37, 1
        %s541 = scalar_lea.sflag [#allocation6], %s540
        %s542 = sand.u32 %s111, 1
        %s543 = smul.addr %s542, 8
        %s544 = scalar_lea.vmem [#allocation7], %s543
        %p545 = pneg %p124
        %p546 = pneg %p121
        %p547 = pneg %p145
        %p548 = pneg %p142
        %p549 = pneg %p166
        %p550 = pneg %p163
        %p551 = pneg %p187
        %p552 = pneg %p184
        %p553 = pneg %p208
        %p554 = pneg %p205
        %p555 = pneg %p229
        %p556 = pneg %p226
        %p557 = pneg %p250
        %p558 = pneg %p247
        %p559 = pneg %p271
        %p560 = pneg %p268
        %p561 = pneg %p299
        %p562 = pneg %p296
        %s563 = sand.u32 %s286, 1
        %s564 = scalar_lea.sflag [#allocation4], %s563
        %s565 = sand.u32 %s286, 1
        %s566 = smul.addr %s565, 8
        %s567 = scalar_lea.vmem [#allocation14], %s566
        %p568 = pneg %p327
        %p569 = pneg %p324
        %s570 = sand.u32 %s314, 1
        %s571 = scalar_lea.sflag [#allocation16], %s570
        %s572 = sand.u32 %s314, 1
        %s573 = smul.addr %s572, 32
        %s574 = scalar_lea.vmem [#allocation15], %s573
        %v575 = vld [vmem:[%s480] sm:$0xff]
        %v576 = vld [vmem:[%s490] sm:$0xff]
        %v577 = vld [vmem:[%s500] sm:$0xff]
        %v578 = vld [vmem:[#allocation8] sm:$0xff]
        %v579 = vld [vmem:[#allocation8 + $0x8] sm:$0xff]
        %v580 = vld [vmem:[#allocation8 + $0x10] sm:$0xff]
        %v581 = vld [vmem:[#allocation8 + $0x18] sm:$0xff]
        %vm582 = vcmask 261120
        %v584 = vsel %vm582, %v575, 0
        %586 = vmatpush.msra.mxu0 0.0
        %587 = vmatpush.msra.mxu0 0.0
        %588 = vmatpush.msra.mxu0 0.0
        %589 = vmatpush.msra.mxu0 0.0
        %590 = vmatpush.msra.mxu0 0.0
        %591 = vmatpush.msra.mxu0 0.0
        %592 = vmatpush.msra.mxu0 0.0
        %593 = vmatpush.msra.mxu0 0.0
        %594 = vmatpush.msra.mxu0 0.0
        %595 = vmatpush.msra.mxu0 0.0
        %596 = vmatpush.msra.mxu0 0.0
        %597 = vmatpush.msra.mxu0 0.0
        %598 = vmatpush.msra.mxu0 %v581
        %599 = vmatpush.msra.mxu0 %v580
        %600 = vmatpush.msra.mxu0 %v579
        %601 = vmatpush.msra.mxu0 %v578
        %602 = vmatmul.f32.gmra.mxu0 %v584
        %v603 = vpop.f32.mrf.mxu0
        %v604 = vadd.f32 0.0, %v603
        %605 = vdwg.mxu0
        %v606 = vld [vmem:[#allocation10] sm:$0xff]
        %v607 = vld [vmem:[#allocation10 + $0x8] sm:$0xff]
        %v608 = vld [vmem:[#allocation10 + $0x10] sm:$0xff]
        %v609 = vld [vmem:[#allocation10 + $0x18] sm:$0xff]
        %v611 = vsel %vm582, %v576, 0
        %613 = vmatpush.msra.mxu0 0.0
        %614 = vmatpush.msra.mxu0 0.0
        %615 = vmatpush.msra.mxu0 0.0
        %616 = vmatpush.msra.mxu0 0.0
        %617 = vmatpush.msra.mxu0 0.0
        %618 = vmatpush.msra.mxu0 0.0
        %619 = vmatpush.msra.mxu0 0.0
        %620 = vmatpush.msra.mxu0 0.0
        %621 = vmatpush.msra.mxu0 0.0
        %622 = vmatpush.msra.mxu0 0.0
        %623 = vmatpush.msra.mxu0 0.0
        %624 = vmatpush.msra.mxu0 0.0
        %625 = vmatpush.msra.mxu0 %v609
        %626 = vmatpush.msra.mxu0 %v608
        %627 = vmatpush.msra.mxu0 %v607
        %628 = vmatpush.msra.mxu0 %v606
        %629 = vmatmul.f32.gmra.mxu0 %v611
        %v630 = vpop.f32.mrf.mxu0
        %v631 = vadd.f32 0.0, %v630
        %632 = vdwg.mxu0
        %v633 = vld [vmem:[#allocation11] sm:$0xff]
        %v634 = vld [vmem:[#allocation11 + $0x8] sm:$0xff]
        %v635 = vld [vmem:[#allocation11 + $0x10] sm:$0xff]
        %v636 = vld [vmem:[#allocation11 + $0x18] sm:$0xff]
        %v638 = vsel %vm582, %v577, 0
        %640 = vmatpush.msra.mxu0 0.0
        %641 = vmatpush.msra.mxu0 0.0
        %642 = vmatpush.msra.mxu0 0.0
        %643 = vmatpush.msra.mxu0 0.0
        %644 = vmatpush.msra.mxu0 0.0
        %645 = vmatpush.msra.mxu0 0.0
        %646 = vmatpush.msra.mxu0 0.0
        %647 = vmatpush.msra.mxu0 0.0
        %648 = vmatpush.msra.mxu0 0.0
        %649 = vmatpush.msra.mxu0 0.0
        %650 = vmatpush.msra.mxu0 0.0
        %651 = vmatpush.msra.mxu0 0.0
        %652 = vmatpush.msra.mxu0 %v636
        %653 = vmatpush.msra.mxu0 %v635
        %654 = vmatpush.msra.mxu0 %v634
        %655 = vmatpush.msra.mxu0 %v633
        %656 = vmatmul.f32.gmra.mxu0 %v638
        %v657 = vpop.f32.mrf.mxu0
        %v658 = vadd.f32 0.0, %v657
        %659 = vdwg.mxu0
        %vm660 = vcmask 64512
        %v662 = vsel %vm660, %v604, 0
        %v665 = vsel %vm660, %v631, 0
        %667 = vmatpush.xpose.msra.mxu0 0.0
        %668 = vmatpush.xpose.msra.mxu0 0.0
        %669 = vmatpush.xpose.msra.mxu0 0.0
        %670 = vmatpush.xpose.msra.mxu0 0.0
        %671 = vmatpush.xpose.msra.mxu0 0.0
        %672 = vmatpush.xpose.msra.mxu0 0.0
        %673 = vmatpush.xpose.msra.mxu0 0.0
        %674 = vmatpush.xpose.msra.mxu0 0.0
        %675 = vmatpush.xpose.msra.mxu0 0.0
        %676 = vmatpush.xpose.msra.mxu0 0.0
        %677 = vmatpush.xpose.msra.mxu0 0.0
        %678 = vmatpush.xpose.msra.mxu0 0.0
        %679 = vmatpush.xpose.msra.mxu0 0.0
        %680 = vmatpush.xpose.msra.mxu0 0.0
        %681 = vmatpush.xpose.msra.mxu0 0.0
        %682 = vmatpush.xpose.msra.mxu0 %v665
        %683 = vmatmul.f32.gmra.mxu0 %v662
        %v684 = vpop.f32.mrf.mxu0
        %v685 = vadd.f32 0.0, %v684
        %686 = vdwg.mxu0
        %v687 = vmul.f32 %v685, 0.35355338
        %v688 = vsel %vm660, %v687, -inf
        %689 = vmax.xlane.f32.xlu0 %v688
        %v690 = vpop.xlane.xlu0 %689
        %v691 = vsub.f32 %v687, %v690
        %v692 = vmul.f32 %v691, 1.442695
        %v693 = vpow.pop %v692
        %v694 = vsel %vm660, %v693, 0.0
        %695 = vadd.xlane.f32.xlu0 %v694
        %v696 = vpop.xlane.xlu0 %695
        %v697 = vrcp.pop %v696
        %v698 = vmul.f32 %v693, %v697
        %699 = vst.msk [vmem:[%s574] sm:$0xff] %vm660, %v698
        %v701 = vsel %vm660, %v698, 0
        %703 = vmatpush.msra.mxu0 0.0
        %704 = vmatpush.msra.mxu0 0.0
        %705 = vmatpush.msra.mxu0 0.0
        %706 = vmatpush.msra.mxu0 0.0
        %707 = vmatpush.msra.mxu0 0.0
        %708 = vmatpush.msra.mxu0 0.0
        %709 = vmatpush.msra.mxu0 0.0
        %710 = vmatpush.msra.mxu0 0.0
        %711 = vmatpush.msra.mxu0 0.0
        %712 = vmatpush.msra.mxu0 0.0
        %713 = vmatpush.msra.mxu0 0.0
        %714 = vmatpush.msra.mxu0 0.0
        %715 = vmatpush.msra.mxu0 0.0
        %716 = vmatpush.msra.mxu0 0.0
        %717 = vmatpush.msra.mxu0 0.0
        %718 = vmatpush.msra.mxu0 %v658
        %719 = vmatmul.f32.gmra.mxu0 %v701
        %v720 = vpop.f32.mrf.mxu0
        %v721 = vadd.f32 0.0, %v720
        %722 = vdwg.mxu0
        %723 = vrot.lane.b32.xlu0 %v604, 120
        %v724 = vpop.permute.xlu0 %723
        %725 = vrot.lane.b32.xlu0 %v631, 120
        %v726 = vpop.permute.xlu0 %725
        %v727 = vsel %vm660, %v724, 0
        %v729 = vsel %vm660, %v726, 0
        %731 = vmatpush.xpose.msra.mxu0 0.0
        %732 = vmatpush.xpose.msra.mxu0 0.0
        %733 = vmatpush.xpose.msra.mxu0 0.0
        %734 = vmatpush.xpose.msra.mxu0 0.0
        %735 = vmatpush.xpose.msra.mxu0 0.0
        %736 = vmatpush.xpose.msra.mxu0 0.0
        %737 = vmatpush.xpose.msra.mxu0 0.0
        %738 = vmatpush.xpose.msra.mxu0 0.0
        %739 = vmatpush.xpose.msra.mxu0 0.0
        %740 = vmatpush.xpose.msra.mxu0 0.0
        %741 = vmatpush.xpose.msra.mxu0 0.0
        %742 = vmatpush.xpose.msra.mxu0 0.0
        %743 = vmatpush.xpose.msra.mxu0 0.0
        %744 = vmatpush.xpose.msra.mxu0 0.0
        %745 = vmatpush.xpose.msra.mxu0 0.0
        %746 = vmatpush.xpose.msra.mxu0 %v729
        %747 = vmatmul.f32.gmra.mxu0 %v727
        %v748 = vpop.f32.mrf.mxu0
        %v749 = vadd.f32 0.0, %v748
        %750 = vdwg.mxu0
        %v751 = vmul.f32 %v749, 0.35355338
        %v752 = vsel %vm660, %v751, -inf
        %753 = vmax.xlane.f32.xlu0 %v752
        %v754 = vpop.xlane.xlu0 %753
        %v755 = vsub.f32 %v751, %v754
        %v756 = vmul.f32 %v755, 1.442695
        %v757 = vpow.pop %v756
        %v758 = vsel %vm660, %v757, 0.0
        %759 = vadd.xlane.f32.xlu0 %v758
        %v760 = vpop.xlane.xlu0 %759
        %v761 = vrcp.pop %v760
        %v762 = vmul.f32 %v757, %v761
        %s763 = scalar_lea.vmem %s574, 8 [#allocation15]
        %764 = vst.msk [vmem:[%s763] sm:$0xff] %vm660, %v762
        %766 = vrot.lane.b32.xlu0 %v658, 120
        %v767 = vpop.permute.xlu0 %766
        %v770 = vsel %vm660, %v762, 0
        %772 = vmatpush.msra.mxu0 0.0
        %773 = vmatpush.msra.mxu0 0.0
        %774 = vmatpush.msra.mxu0 0.0
        %775 = vmatpush.msra.mxu0 0.0
        %776 = vmatpush.msra.mxu0 0.0
        %777 = vmatpush.msra.mxu0 0.0
        %778 = vmatpush.msra.mxu0 0.0
        %779 = vmatpush.msra.mxu0 0.0
        %780 = vmatpush.msra.mxu0 0.0
        %781 = vmatpush.msra.mxu0 0.0
        %782 = vmatpush.msra.mxu0 0.0
        %783 = vmatpush.msra.mxu0 0.0
        %784 = vmatpush.msra.mxu0 0.0
        %785 = vmatpush.msra.mxu0 0.0
        %786 = vmatpush.msra.mxu0 0.0
        %787 = vmatpush.msra.mxu0 %v767
        %788 = vmatmul.f32.gmra.mxu0 %v770
        %v789 = vpop.f32.mrf.mxu0
        %v790 = vadd.f32 0.0, %v789
        %791 = vdwg.mxu0
        %792 = vrot.lane.b32.xlu0 %v604, 112
        %v793 = vpop.permute.xlu0 %792
        %794 = vrot.lane.b32.xlu0 %v631, 112
        %v795 = vpop.permute.xlu0 %794
        %v796 = vsel %vm660, %v793, 0
        %v798 = vsel %vm660, %v795, 0
        %800 = vmatpush.xpose.msra.mxu0 0.0
        %801 = vmatpush.xpose.msra.mxu0 0.0
        %802 = vmatpush.xpose.msra.mxu0 0.0
        %803 = vmatpush.xpose.msra.mxu0 0.0
        %804 = vmatpush.xpose.msra.mxu0 0.0
        %805 = vmatpush.xpose.msra.mxu0 0.0
        %806 = vmatpush.xpose.msra.mxu0 0.0
        %807 = vmatpush.xpose.msra.mxu0 0.0
        %808 = vmatpush.xpose.msra.mxu0 0.0
        %809 = vmatpush.xpose.msra.mxu0 0.0
        %810 = vmatpush.xpose.msra.mxu0 0.0
        %811 = vmatpush.xpose.msra.mxu0 0.0
        %812 = vmatpush.xpose.msra.mxu0 0.0
        %813 = vmatpush.xpose.msra.mxu0 0.0
        %814 = vmatpush.xpose.msra.mxu0 0.0
        %815 = vmatpush.xpose.msra.mxu0 %v798
        %816 = vmatmul.f32.gmra.mxu0 %v796
        %v817 = vpop.f32.mrf.mxu0
        %v818 = vadd.f32 0.0, %v817
        %819 = vdwg.mxu0
        %v820 = vmul.f32 %v818, 0.35355338
        %v821 = vsel %vm660, %v820, -inf
        %822 = vmax.xlane.f32.xlu0 %v821
        %v823 = vpop.xlane.xlu0 %822
        %v824 = vsub.f32 %v820, %v823
        %v825 = vmul.f32 %v824, 1.442695
        %v826 = vpow.pop %v825
        %v827 = vsel %vm660, %v826, 0.0
        %828 = vadd.xlane.f32.xlu0 %v827
        %v829 = vpop.xlane.xlu0 %828
        %v830 = vrcp.pop %v829
        %v831 = vmul.f32 %v826, %v830
        %s832 = scalar_lea.vmem %s574, 16 [#allocation15]
        %833 = vst.msk [vmem:[%s832] sm:$0xff] %vm660, %v831
        %834 = vrot.lane.b32.xlu0 %v658, 112
        %v835 = vpop.permute.xlu0 %834
        %v838 = vsel %vm660, %v831, 0
        %840 = vmatpush.msra.mxu0 0.0
        %841 = vmatpush.msra.mxu0 0.0
        %842 = vmatpush.msra.mxu0 0.0
        %843 = vmatpush.msra.mxu0 0.0
        %844 = vmatpush.msra.mxu0 0.0
        %845 = vmatpush.msra.mxu0 0.0
        %846 = vmatpush.msra.mxu0 0.0
        %847 = vmatpush.msra.mxu0 0.0
        %848 = vmatpush.msra.mxu0 0.0
        %849 = vmatpush.msra.mxu0 0.0
        %850 = vmatpush.msra.mxu0 0.0
        %851 = vmatpush.msra.mxu0 0.0
        %852 = vmatpush.msra.mxu0 0.0
        %853 = vmatpush.msra.mxu0 0.0
        %854 = vmatpush.msra.mxu0 0.0
        %855 = vmatpush.msra.mxu0 %v835
        %856 = vmatmul.f32.gmra.mxu0 %v838
        %v857 = vpop.f32.mrf.mxu0
        %v858 = vadd.f32 0.0, %v857
        %859 = vdwg.mxu0
        %860 = vrot.lane.b32.xlu0 %v604, 104
        %v861 = vpop.permute.xlu0 %860
        %862 = vrot.lane.b32.xlu0 %v631, 104
        %v863 = vpop.permute.xlu0 %862
        %v864 = vsel %vm660, %v861, 0
        %v866 = vsel %vm660, %v863, 0
        %868 = vmatpush.xpose.msra.mxu0 0.0
        %869 = vmatpush.xpose.msra.mxu0 0.0
        %870 = vmatpush.xpose.msra.mxu0 0.0
        %871 = vmatpush.xpose.msra.mxu0 0.0
        %872 = vmatpush.xpose.msra.mxu0 0.0
        %873 = vmatpush.xpose.msra.mxu0 0.0
        %874 = vmatpush.xpose.msra.mxu0 0.0
        %875 = vmatpush.xpose.msra.mxu0 0.0
        %876 = vmatpush.xpose.msra.mxu0 0.0
        %877 = vmatpush.xpose.msra.mxu0 0.0
        %878 = vmatpush.xpose.msra.mxu0 0.0
        %879 = vmatpush.xpose.msra.mxu0 0.0
        %880 = vmatpush.xpose.msra.mxu0 0.0
        %881 = vmatpush.xpose.msra.mxu0 0.0
        %882 = vmatpush.xpose.msra.mxu0 0.0
        %883 = vmatpush.xpose.msra.mxu0 %v866
        %884 = vmatmul.f32.gmra.mxu0 %v864
        %v885 = vpop.f32.mrf.mxu0
        %v886 = vadd.f32 0.0, %v885
        %887 = vdwg.mxu0
        %v888 = vmul.f32 %v886, 0.35355338
        %v889 = vsel %vm660, %v888, -inf
        %890 = vmax.xlane.f32.xlu0 %v889
        %v891 = vpop.xlane.xlu0 %890
        %v892 = vsub.f32 %v888, %v891
        %v893 = vmul.f32 %v892, 1.442695
        %v894 = vpow.pop %v893
        %v895 = vsel %vm660, %v894, 0.0
        %896 = vadd.xlane.f32.xlu0 %v895
        %v897 = vpop.xlane.xlu0 %896
        %v898 = vrcp.pop %v897
        %v899 = vmul.f32 %v894, %v898
        %s900 = scalar_lea.vmem %s574, 24 [#allocation15]
        %901 = vst.msk [vmem:[%s900] sm:$0xff] %vm660, %v899
        %902 = vrot.lane.b32.xlu0 %v658, 104
        %v903 = vpop.permute.xlu0 %902
        %v906 = vsel %vm660, %v899, 0
        %908 = vmatpush.msra.mxu0 0.0
        %909 = vmatpush.msra.mxu0 0.0
        %910 = vmatpush.msra.mxu0 0.0
        %911 = vmatpush.msra.mxu0 0.0
        %912 = vmatpush.msra.mxu0 0.0
        %913 = vmatpush.msra.mxu0 0.0
        %914 = vmatpush.msra.mxu0 0.0
        %915 = vmatpush.msra.mxu0 0.0
        %916 = vmatpush.msra.mxu0 0.0
        %917 = vmatpush.msra.mxu0 0.0
        %918 = vmatpush.msra.mxu0 0.0
        %919 = vmatpush.msra.mxu0 0.0
        %920 = vmatpush.msra.mxu0 0.0
        %921 = vmatpush.msra.mxu0 0.0
        %922 = vmatpush.msra.mxu0 0.0
        %923 = vmatpush.msra.mxu0 %v903
        %924 = vmatmul.f32.gmra.mxu0 %v906
        %v925 = vpop.f32.mrf.mxu0
        %v926 = vadd.f32 0.0, %v925
        %927 = vdwg.mxu0
        %929 = vrot.lane.b32.xlu0 %v790, 8
        %v930 = vpop.permute.xlu0 %929
        %933 = vrot.lane.b32.xlu0 %v858, 16
        %v934 = vpop.permute.xlu0 %933
        %937 = vrot.lane.b32.xlu0 %v926, 24
        %v938 = vpop.permute.xlu0 %937
        %v940 = vsel %vm660, %v721, %v930
        %vm941 = vcmask 130048
        %v942 = vsel %vm941, %v940, %v934
        %vm943 = vcmask 195584
        %v944 = vsel %vm943, %v942, %v938
        %v945 = vld [vmem:[#allocation13] sm:$0xff]
        %v946 = vld [vmem:[#allocation13 + $0x8] sm:$0xff]
        %v947 = vld [vmem:[#allocation13 + $0x10] sm:$0xff]
        %v948 = vld [vmem:[#allocation13 + $0x18] sm:$0xff]
        %v949 = vld [vmem:[%s7] sm:$0x1]
        %v951 = vperm.slane %v949, 0
        %v954 = vsel %vm582, %v944, 0
        %956 = vmatpush.msra.mxu0 0.0
        %957 = vmatpush.msra.mxu0 0.0
        %958 = vmatpush.msra.mxu0 0.0
        %959 = vmatpush.msra.mxu0 0.0
        %960 = vmatpush.msra.mxu0 0.0
        %961 = vmatpush.msra.mxu0 0.0
        %962 = vmatpush.msra.mxu0 0.0
        %963 = vmatpush.msra.mxu0 0.0
        %964 = vmatpush.msra.mxu0 0.0
        %965 = vmatpush.msra.mxu0 0.0
        %966 = vmatpush.msra.mxu0 0.0
        %967 = vmatpush.msra.mxu0 0.0
        %968 = vmatpush.msra.mxu0 %v948
        %969 = vmatpush.msra.mxu0 %v947
        %970 = vmatpush.msra.mxu0 %v946
        %971 = vmatpush.msra.mxu0 %v945
        %972 = vmatmul.f32.gmra.mxu0 %v954
        %v973 = vpop.f32.mrf.mxu0
        %v974 = vadd.f32 %v951, %v973
        %975 = vdwg.mxu0
        %v976 = vadd.f32 %v974, %v575
        %v977 = vsel %vm582, %v976, 0.0
        %978 = vadd.xlane.f32.xlu0 %v977
        %v979 = vpop.xlane.xlu0 %978
        %v980 = vrcp.pop 32.0
        %v981 = vmul.f32 32.0, %v980
        %v982 = vsub.f32 1.0, %v981
        %v983 = vmul.f32 %v980, %v982
        %v984 = vadd.f32 %v980, %v983
        %vm985 = vweird.f32 %v980
        %v986 = vsel %vm985, %v980, %v984
        %v987 = vmul.f32 %v979, %v986
        %v988 = vsub.f32 %v976, %v987
        %v989 = vmul.f32 %v988, %v988
        %v990 = vsel %vm582, %v989, 0.0
        %991 = vadd.xlane.f32.xlu0 %v990
        %v992 = vpop.xlane.xlu0 %991
        %v993 = vmul.f32 %v992, %v986
        %v994 = vadd.f32 %v993, 1e-05
        %v995 = vrsqrt.pop %v994
        %v996 = vmul.f32 %v995, %v994
        %v997 = vmul.f32 %v996, %v995
        %v998 = vmul.f32 0.5, %v997
        %v999 = vsub.f32 1.5, %v998
        %v1000 = vmul.f32 %v995, %v999
        %vm1001 = vweird.f32 %v994
        %vm1002 = vweird.f32 %v995
        %vm1003 = vmor %vm1001, %vm1002
        %v1004 = vsel %vm1003, %v995, %v1000
        %v1005 = vmul.f32 %v988, %v1004
        %v1006 = vld [vmem:[%s8] sm:$0x1]
        %v1008 = vperm.slane %v1006, 0
        %v1010 = vmul.f32 %v1005, %v1008
        %v1011 = vld [vmem:[%s9] sm:$0x1]
        %v1013 = vperm.slane %v1011, 0
        %v1015 = vadd.f32 %v1010, %v1013
        %1016 = vst.msk [vmem:[%s567] sm:$0xff] %vm582, %v1015
        %s1017 = sand.u32 %s286, 1
        %s1018 = scalar_lea.sflag [#allocation4], %s1017
        %s1019 = sand.u32 %s286, 1
        %s1020 = smul.addr %s1019, 8
        %s1021 = scalar_lea.vmem [#allocation14], %s1020
        %s1022 = sand.u32 %s314, 1
        %s1023 = scalar_lea.sflag [#allocation16], %s1022
        %s1024 = sand.u32 %s314, 1
        %s1025 = smul.addr %s1024, 32
        %s1026 = scalar_lea.vmem [#allocation15], %s1025
        // Predicated region
        $region89: #{tpu_custom_call.1} parent=59 // pred_check
          %p1027 = pneg %p296
        $region90: #{tpu_custom_call.1} parent=59 // pred_check_branch
          %1029 = sbr.rel (%p1027) target = $region92
        $region91: #{tpu_custom_call.1} parent=59 // pred_region
          %1031 = vsyncadd %s1018, 0
          %s1032 = sadd.s32 %s42, %s41
          %s1033 = smul.addr %s1032, 8
          %s1034 = scalar_lea.hbm %s10, %s1033
          %s1036 = sshll.u32 %s1021, 4
          %s1037 = int_to_ptr.vmem [resolvable:$true] %s1036
          %s1038 = sshll.u32 %s1034, 4
          %s1039 = int_to_ptr.hbm [resolvable:$true] %s1038
          %1041 = dma.vmem_to_hbm [thread:$0]  %s1037, 128, %s1039, %s1018
        $region92: #{tpu_custom_call.1} parent=59 // pred_fallthru
          _
        // Predicated region
        $region93: #{tpu_custom_call.1} parent=59 // pred_check
          %p1042 = pneg %p324
        $region94: #{tpu_custom_call.1} parent=59 // pred_check_branch
          %1044 = sbr.rel (%p1042) target = $region96
        $region95: #{tpu_custom_call.1} parent=59 // pred_region
          %1046 = vsyncadd %s1023, 0
          %s1047 = smul.addr %s41, 4
          %s1048 = sadd.s32 %s42, %s1047
          %s1049 = smul.addr %s1048, 8
          %s1050 = scalar_lea.hbm %s11, %s1049
          %s1051 = sshll.u32 %s1026, 4
          %s1052 = int_to_ptr.vmem [resolvable:$true] %s1051
          %s1053 = sshll.u32 %s1050, 4
          %s1054 = int_to_ptr.hbm [resolvable:$true] %s1053
          %1059 = dma.vmem_to_hbm [thread:$0]  %s1052, 512, %s1054, %s1023, 128, 128, 8
        $region96: #{tpu_custom_call.1} parent=59 // pred_fallthru
          _
      $region60: #{tpu_custom_call.1} parent=5 // pred_fallthru
        _
      %p1060 = scmp.le.s32.totalorder 2, %s32
      // Predicated region
      $region97: #{tpu_custom_call.1} parent=5 // pred_check
        %p1061 = pneg %p1060
      $region98: #{tpu_custom_call.1} parent=5 // pred_check_branch
        %1063 = sbr.rel (%p1061) target = $region100
      $region99: #{tpu_custom_call.1} parent=5 // pred_region
        %s1064 = ssub.s32 %s32, 2
        // Predicated region
        $region101: #{tpu_custom_call.1} parent=99 // pred_check
          %p1065 = pneg %p302
        $region102: #{tpu_custom_call.1} parent=99 // pred_check_branch
          %1067 = sbr.rel (%p1065) target = $region104
        $region103: #{tpu_custom_call.1} parent=99 // pred_region
          %s1068 = sand.u32 %s287, 1
          %s1069 = scalar_lea.sflag [#allocation4], %s1068
          %s1070 = sand.u32 %s287, 1
          %s1071 = smul.addr %s1070, 8
          %s1072 = scalar_lea.vmem [#allocation14], %s1071
          %1074 = dma.done %s1069, 128
        $region104: #{tpu_custom_call.1} parent=99 // pred_fallthru
          _
        // Predicated region
        $region105: #{tpu_custom_call.1} parent=99 // pred_check
          %p1075 = pneg %p330
        $region106: #{tpu_custom_call.1} parent=99 // pred_check_branch
          %1077 = sbr.rel (%p1075) target = $region108
        $region107: #{tpu_custom_call.1} parent=99 // pred_region
          %s1078 = sand.u32 %s315, 1
          %s1079 = scalar_lea.sflag [#allocation16], %s1078
          %s1080 = sand.u32 %s315, 1
          %s1081 = smul.addr %s1080, 32
          %s1082 = scalar_lea.vmem [#allocation15], %s1081
          %1084 = dma.done %s1079, 512
        $region108: #{tpu_custom_call.1} parent=99 // pred_fallthru
          _
      $region100: #{tpu_custom_call.1} parent=5 // pred_fallthru
        _
    $region6: #{tpu_custom_call.1} parent=1 // loop_footer
      %s36 = sadd.s32 1, %s32
    $region7: #{tpu_custom_call.1} parent=1 // loop_footer_branch
      %31 = sbr.rel target = $region3
    $region8: #{tpu_custom_call.1} parent=1 // loop_exit
      _
    %1085 = vsyncpa [#allocation3], 1
    %s1086 = scalar_lea.sflag [#allocation3], 1
    %1087 = vsyncpa %s1086, 1
    %1088 = vsyncpa [#allocation6], 1
    %s1089 = scalar_lea.sflag [#allocation6], 1
    %1090 = vsyncpa %s1089, 1
    %1091 = vsyncpa [#allocation9], 1
    %1092 = vsyncpa [#allocation12], 1
    %1093 = vsyncpa [#allocation4], 1
    %s1094 = scalar_lea.sflag [#allocation4], 1
    %1095 = vsyncpa %s1094, 1
    %1096 = vsyncpa [#allocation16], 1
    %s1097 = scalar_lea.sflag [#allocation16], 1
    %1098 = vsyncpa %s1097, 1

</llo_original>
